<compile_context>
chip_gen: v6e
topology: v6e:2x2x1
jax: 0.10.0
libtpu: 0.0.40
codegen_flags: <defaults>
</compile_context>

<pallas_src>
import jax
import jax.numpy as jnp
from jax import lax
from jax.experimental import pallas as pl
from jax.experimental.pallas import tpu as pltpu

# ----------------------------- config (small) -----------------------------
B = 2               # batch
MAX_TOKENS = 8      # OCR tokens per sample
QUEST_DIM = 32      # text feature dim
IMG_DIM = 32        # grid / object feature dim
MAX_OBJECTS = 8
EMBED_DIM = 32      # GloVe / OCR embedding dim
GRID_CELLS = 16     # flattened spatial grid (e.g. 4x4)
VOCAB_SIZE = 40 + 1 # config['vocab_size'] + 1
HID = 64            # multi-modal hidden dim

assert IMG_DIM == EMBED_DIM, "fused feature slab assumes one feature width"
FEAT_D = IMG_DIM
N_ALL = GRID_CELLS + MAX_OBJECTS + MAX_TOKENS      # 32 rows in feature slab
COMB_K = QUEST_DIM + IMG_DIM + IMG_DIM + EMBED_DIM # 128 combine fan-in
OUT_COLS = VOCAB_SIZE + MAX_TOKENS                 # 49 real output columns
OUT_PAD = 128                                      # lane-dense output width
NEG = -1e9                                         # python float -> jaxpr literal


# ------------------------------- kernel -----------------------------------
def trainer_forward_kernel(txt_ref, feats_ref, lens_ref,
                           wq_ref, wc_ref, bc_ref, wo_ref, bo_ref, out_ref):
    f32 = jnp.float32
    bf16 = jnp.bfloat16

    txt = txt_ref[...]                 # [TB, Q]        bf16
    feats = feats_ref[...]             # [TB, 32, 32]   bf16  (grid | obj | ocr)
    lens = lens_ref[...]               # [TB, 2]        int32 (num_objects, ocr_len)
    tb = txt.shape[0]

    # ---- fused query projection: one bf16 MXU matmul, f32 accumulation ----
    q_all = jnp.dot(txt, wq_ref[...], preferred_element_type=f32)      # [TB, 96]
    q3 = jnp.stack([q_all[:, 0:IMG_DIM],
                    q_all[:, IMG_DIM:2 * IMG_DIM],
                    q_all[:, 2 * IMG_DIM:3 * IMG_DIM]], axis=1)        # [TB, 3, 32]

    # ---- fused attention scores for grid / obj / ocr: one batched MXU dot ----
    # 'bjd,bnd->bjn'
    s_all = lax.dot_general(q3.astype(bf16), feats,
                            (((2,), (2,)), ((0,), (0,))),
                            preferred_element_type=f32)                # [TB, 3, 32]

    # segment + length masks built from iota compares (bool, no f32 masks)
    n_iota = lax.broadcasted_iota(jnp.int32, (tb, 3, N_ALL), 2)
    j_iota = lax.broadcasted_iota(jnp.int32, (tb, 3, N_ALL), 1)
    num_obj = lens[:, 0:1][..., None]                                  # [TB, 1, 1]
    ocr_len = lens[:, 1:2][..., None]                                  # [TB, 1, 1]
    grid_m = (j_iota == 0) & (n_iota < GRID_CELLS)
    obj_m = ((j_iota == 1) & (n_iota >= GRID_CELLS)
             & (n_iota < GRID_CELLS + num_obj))
    ocr_m = ((j_iota == 2) & (n_iota >= GRID_CELLS + MAX_OBJECTS)
             & (n_iota < GRID_CELLS + MAX_OBJECTS + ocr_len))
    mask = grid_m | obj_m | ocr_m                                      # [TB, 3, 32]

    # masked softmax per (sample, mode) row; f32 element-wise math (v5e-safe)
    s_m = jnp.where(mask, s_all, NEG)
    m = jnp.max(s_m, axis=-1, keepdims=True)
    e = jnp.exp(s_m - m)
    denom = jnp.sum(e, axis=-1, keepdims=True)
    p = e * pl.reciprocal(denom, approx=True)                          # EUP slot
    p = jnp.where(mask, p, 0.0)          # also zeroes fully-masked (padded) rows

    # all three contexts in one batched MXU dot: 'bjn,bnd->bjd'
    ctx = lax.dot_general(p.astype(bf16), feats,
                          (((2,), (1,)), ((0,), (0,))),
                          preferred_element_type=f32)                  # [TB, 3, 32]

    # ---- CombineModes: four K=32 MXU dots + broadcast bias (no concats) ----
    g_ctx = ctx[:, 0, :].astype(bf16)    # GridFeaturesAndText context
    o_ctx = ctx[:, 1, :].astype(bf16)    # ObjectFeaturesAndText context
    r_ctx = ctx[:, 2, :].astype(bf16)    # VectorizedOCRTokensAndText context
    h = jnp.dot(txt, wc_ref[0:QUEST_DIM, :], preferred_element_type=f32)
    h = h + jnp.dot(g_ctx, wc_ref[QUEST_DIM:QUEST_DIM + IMG_DIM, :],
                    preferred_element_type=f32)
    h = h + jnp.dot(o_ctx, wc_ref[QUEST_DIM + IMG_DIM:QUEST_DIM + 2 * IMG_DIM, :],
                    preferred_element_type=f32)
    h = h + jnp.dot(r_ctx, wc_ref[QUEST_DIM + 2 * IMG_DIM:COMB_K, :],
                    preferred_element_type=f32)
    h = jnp.maximum(h + bc_ref[...], 0.0)                              # [TB, HID]

    # ---- vocab scores (lane-padded to 128) + copy query in one MXU dot ----
    out_all = (jnp.dot(h.astype(bf16), wo_ref[...], preferred_element_type=f32)
               + bo_ref[...])                                          # [TB, 160]
    scores_full = out_all[:, :OUT_PAD]   # lanes: vocab | 0 (copy lanes) | NEG pad
    copy_q = out_all[:, OUT_PAD:]                                      # [TB, 32]

    # copy scores vs OCR embeddings: batched MXU dot, NEG-masked by ocr length
    ocr = feats[:, GRID_CELLS + MAX_OBJECTS:, :]                       # [TB, 8, 32]
    cs = lax.dot_general(copy_q.astype(bf16)[:, None, :], ocr,
                         (((2,), (2,)), ((0,), (0,))),
                         preferred_element_type=f32)[:, 0, :]          # [TB, 8]
    ocr_mask = (lax.broadcasted_iota(jnp.int32, (tb, MAX_TOKENS), 1)
                < lens[:, 1:2])
    cs = jnp.where(ocr_mask, cs, NEG)

    # scatter copy scores into lanes [VOCAB_SIZE, VOCAB_SIZE+8) with a tiny
    # 0/1 placement matmul (exact in f32; avoids lane concat / roll).
    r_iota = lax.broadcasted_iota(jnp.int32, (MAX_TOKENS, OUT_PAD), 0)
    c_iota = lax.broadcasted_iota(jnp.int32, (MAX_TOKENS, OUT_PAD), 1)
    place = (c_iota == r_iota + VOCAB_SIZE).astype(f32)                # [8, 128]
    full = scores_full + jnp.dot(cs, place, preferred_element_type=f32)

    # ---- exact joint softmax over [vocab | copy | pad], lane-dense store ----
    m2 = jnp.max(full, axis=-1, keepdims=True)
    e2 = jnp.exp(full - m2)
    inv = 1.0 / jnp.sum(e2, axis=-1, keepdims=True)   # exact: rows sum to 1
    out_ref[...] = e2 * inv


# ------------------------------- wrapper -----------------------------------
def trainer_forward(txt_fts, img_grid_fts, img_obj_fts, num_objects,
                    ocr_embeddings, ocr_lengths, params, *, block_b=8):
    """Fused Pallas implementation of Trainer.forward's attention+combine path.

    Returns predictions [B, VOCAB_SIZE + MAX_TOKENS] (vocab probs || copy probs,
    joint softmax).  block_b: batch tile per grid step; use 128 on v5e and 256
    on v6e/v7x for production batches (re-budget vmem_limit_bytes accordingly,
    v7x has only 64 MiB physical VMEM per TensorCore).
    """
    b = txt_fts.shape[0]
    b_pad = ((b + block_b - 1) // block_b) * block_b

    def pad_b(x):
        return jnp.pad(x, ((0, b_pad - x.shape[0]),) + ((0, 0),) * (x.ndim - 1))

    # activations shipped as bf16 (f32 MXU accumulation inside the kernel)
    txt = pad_b(txt_fts).astype(jnp.bfloat16)
    feats = pad_b(jnp.concatenate(
        [img_grid_fts, img_obj_fts, ocr_embeddings], axis=1)).astype(jnp.bfloat16)
    lens = pad_b(jnp.stack([num_objects, ocr_lengths], axis=-1).astype(jnp.int32))

    wq = params['w_q_all'].astype(jnp.bfloat16)   # [Q, 3*D]        = [32, 96]
    wc = params['w_comb'].astype(jnp.bfloat16)    # [COMB_K, HID]   = [128, 64]
    bc = params['b_comb'].astype(jnp.float32)     # [1, HID]
    wo = params['w_out'].astype(jnp.bfloat16)     # [HID, 128+E]    = [64, 160]
    bo = params['b_out'].astype(jnp.float32)      # [1, 128+E]

    grid = (b_pad // block_b,)
    out = pl.pallas_call(
        trainer_forward_kernel,
        out_shape=jax.ShapeDtypeStruct((b_pad, OUT_PAD), jnp.float32),
        grid=grid,
        in_specs=[
            # per-batch-tile inputs
            pl.BlockSpec((block_b, QUEST_DIM), lambda i: (i, 0)),
            pl.BlockSpec((block_b, N_ALL, FEAT_D), lambda i: (i, 0, 0)),
            pl.BlockSpec((block_b, 2), lambda i: (i, 0)),
            # weight slabs: constant index_map -> DMA'd once, VMEM-resident
            pl.BlockSpec((QUEST_DIM, 3 * IMG_DIM), lambda i: (0, 0)),
            pl.BlockSpec((COMB_K, HID), lambda i: (0, 0)),
            pl.BlockSpec((1, HID), lambda i: (0, 0)),
            pl.BlockSpec((HID, OUT_PAD + EMBED_DIM), lambda i: (0, 0)),
            pl.BlockSpec((1, OUT_PAD + EMBED_DIM), lambda i: (0, 0)),
        ],
        out_specs=pl.BlockSpec((block_b, OUT_PAD), lambda i: (i, 0)),
        compiler_params=pltpu.CompilerParams(
            dimension_semantics=("parallel",),
            # real footprint at block_b=8 is well under 1 MiB; raise when
            # scaling block_b to 128/256.
            vmem_limit_bytes=4 * 1024 * 1024),
    )(txt, feats, lens, wq, wc, bc, wo, bo)

    return out[:b, :OUT_COLS]


# ------------------------- deterministic params -----------------------------
def init_params(key):
    ks = jax.random.split(key, 6)
    f32 = jnp.float32

    def w(k, shape, fan_in):
        return jax.random.normal(k, shape, f32) / jnp.sqrt(float(fan_in))

    # query projections packed: [Q, grid(D) | obj(D) | ocr(E)]
    w_q_all = jnp.concatenate([w(ks[0], (QUEST_DIM, IMG_DIM), QUEST_DIM),
                               w(ks[1], (QUEST_DIM, IMG_DIM), QUEST_DIM),
                               w(ks[2], (QUEST_DIM, EMBED_DIM), QUEST_DIM)], axis=1)

    # CombineModes: rows = [txt | grid_ctx | obj_ctx | ocr_ctx], bias separate
    w_comb = w(ks[3], (COMB_K, HID), COMB_K)            # [128, HID]
    b_comb = jnp.zeros((1, HID), f32)

    # output head packed, lane-padded:
    #   cols [0, 41)      vocab projection
    #   cols [41, 128)    zeros (copy-score lanes + pad lanes)
    #   cols [128, 160)   copy-query projection
    wv = w(ks[4], (HID, VOCAB_SIZE), HID)
    wcp = w(ks[5], (HID, EMBED_DIM), HID)
    w_out = jnp.concatenate(
        [wv, jnp.zeros((HID, OUT_PAD - VOCAB_SIZE), f32), wcp], axis=1)  # [64, 160]
    b_out = jnp.concatenate(
        [jnp.zeros((1, VOCAB_SIZE), f32),                              # vocab bias
         jnp.zeros((1, MAX_TOKENS), f32),                              # copy lanes
         jnp.full((1, OUT_PAD - VOCAB_SIZE - MAX_TOKENS), NEG, f32),   # pad lanes
         jnp.zeros((1, EMBED_DIM), f32)], axis=1)                      # copy-q bias

    return {'w_q_all': w_q_all, 'w_comb': w_comb, 'b_comb': b_comb,
            'w_out': w_out, 'b_out': b_out}


if __name__ == "__main__":
    key = jax.random.PRNGKey(0)
    k_in = jax.random.split(key, 8)

    # Synthetic outputs of the external feature extractors / GloVe lookup.
    # TODO(synk): grid/object/text CNN+LSTM extractors and the GloVe file lookup
    #             are external modules (file IO / torchvision); synthesized here.
    txt_fts = jax.random.normal(k_in[0], (B, QUEST_DIM), jnp.float32)
    img_grid_fts = jax.random.normal(k_in[1], (B, GRID_CELLS, IMG_DIM), jnp.float32)
    img_obj_fts = jax.random.normal(k_in[2], (B, MAX_OBJECTS, IMG_DIM), jnp.float32)
    num_objects = jnp.array([5, 3], jnp.int32)
    ocr_embeddings = jax.random.normal(k_in[3], (B, MAX_TOKENS, EMBED_DIM), jnp.float32)
    ocr_lengths = jnp.array([4, 7], jnp.int32)

    params = init_params(k_in[4])

    preds = trainer_forward(txt_fts, img_grid_fts, img_obj_fts, num_objects,
                            ocr_embeddings, ocr_lengths, params)
    preds = jax.block_until_ready(preds)

    assert preds.shape == (B, VOCAB_SIZE + MAX_TOKENS)
    assert bool(jnp.all(jnp.isfinite(preds)))
    # joint softmax -> rows sum to ~1 (padded lanes carry exactly zero mass)
    assert bool(jnp.allclose(jnp.sum(preds, axis=-1), 1.0, atol=1e-4))
    print("KERNEL_OK")
</pallas_src>

<mosaic_0001>
module attributes {stable_mosaic.version = 11 : i64} {
  func.func @trainer_forward_kernel(%arg0: i32, %arg1: memref<8x32xbf16, #tpu.memory_space<vmem>>, %arg2: memref<8x32x32xbf16, #tpu.memory_space<vmem>>, %arg3: memref<8x2xi32, #tpu.memory_space<vmem>>, %arg4: memref<32x96xbf16, #tpu.memory_space<vmem>>, %arg5: memref<128x64xbf16, #tpu.memory_space<vmem>>, %arg6: memref<1x64xf32, #tpu.memory_space<vmem>>, %arg7: memref<64x160xbf16, #tpu.memory_space<vmem>>, %arg8: memref<1x160xf32, #tpu.memory_space<vmem>>, %arg9: memref<8x128xf32, #tpu.memory_space<vmem>>) attributes {dimension_semantics = [#tpu.dimension_semantics<parallel>], iteration_bounds = array<i64: 1>, scalar_prefetch = 0 : i64, scratch_operands = 0 : i64, tpu.core_type = #tpu.core_type<tc>, window_params = [{transform_indices = @transform_0, window_bounds = array<i64: 8, 32>}, {transform_indices = @transform_1, window_bounds = array<i64: 8, 32, 32>}, {transform_indices = @transform_2, window_bounds = array<i64: 8, 2>}, {pipeline_mode = #tpu.pipeline_mode<synchronous>, transform_indices = @transform_3, window_bounds = array<i64: 32, 96>}, {pipeline_mode = #tpu.pipeline_mode<synchronous>, transform_indices = @transform_4, window_bounds = array<i64: 128, 64>}, {pipeline_mode = #tpu.pipeline_mode<synchronous>, transform_indices = @transform_5, window_bounds = array<i64: 1, 64>}, {pipeline_mode = #tpu.pipeline_mode<synchronous>, transform_indices = @transform_6, window_bounds = array<i64: 64, 160>}, {pipeline_mode = #tpu.pipeline_mode<synchronous>, transform_indices = @transform_7, window_bounds = array<i64: 1, 160>}, {transform_indices = @transform_8, window_bounds = array<i64: 8, 128>}]} {
    %c0 = arith.constant 0 : index
    %c0_0 = arith.constant 0 : index
    %0 = vector.load %arg1[%c0, %c0_0] : memref<8x32xbf16, #tpu.memory_space<vmem>>, vector<8x32xbf16>
    %c0_1 = arith.constant 0 : index
    %c0_2 = arith.constant 0 : index
    %c0_3 = arith.constant 0 : index
    %1 = vector.load %arg2[%c0_1, %c0_2, %c0_3] : memref<8x32x32xbf16, #tpu.memory_space<vmem>>, vector<8x32x32xbf16>
    %c0_4 = arith.constant 0 : index
    %c0_5 = arith.constant 0 : index
    %2 = vector.load %arg3[%c0_4, %c0_5] : memref<8x2xi32, #tpu.memory_space<vmem>>, vector<8x2xi32>
    %c0_6 = arith.constant 0 : index
    %c0_7 = arith.constant 0 : index
    %3 = vector.load %arg4[%c0_6, %c0_7] : memref<32x96xbf16, #tpu.memory_space<vmem>>, vector<32x96xbf16>
    %cst = arith.constant dense<0.000000e+00> : vector<8x96xf32>
    %4 = tpu.matmul %0, %3, %cst {dimension_numbers = #tpu.dot_dimension_numbers<[1], [0], [0], [1], [0, 0, 1, 1], [], []>} : vector<8x32xbf16>, vector<32x96xbf16>, vector<8x96xf32> -> vector<8x96xf32>
    %5 = vector.extract_strided_slice %4 {offsets = [0, 0], sizes = [8, 32], strides = [1, 1]} : vector<8x96xf32> to vector<8x32xf32>
    %6 = vector.extract_strided_slice %4 {offsets = [0, 32], sizes = [8, 32], strides = [1, 1]} : vector<8x96xf32> to vector<8x32xf32>
    %7 = vector.extract_strided_slice %4 {offsets = [0, 64], sizes = [8, 32], strides = [1, 1]} : vector<8x96xf32> to vector<8x32xf32>
    %8 = vector.shape_cast %5 : vector<8x32xf32> to vector<8x1x32xf32>
    %9 = vector.shape_cast %6 : vector<8x32xf32> to vector<8x1x32xf32>
    %10 = vector.shape_cast %7 : vector<8x32xf32> to vector<8x1x32xf32>
    %11 = tpu.concatenate %8, %9, %10 in 1 : vector<8x1x32xf32>, vector<8x1x32xf32>, vector<8x1x32xf32> -> vector<8x3x32xf32>
    %12 = arith.truncf %11 : vector<8x3x32xf32> to vector<8x3x32xbf16>
    %cst_8 = arith.constant dense<0.000000e+00> : vector<8x3x32xf32>
    %13 = tpu.matmul %12, %1, %cst_8 {dimension_numbers = #tpu.dot_dimension_numbers<[2], [2], [1], [1], [0, 0, 0, 1, 1, 1], [0], [0]>} : vector<8x3x32xbf16>, vector<8x32x32xbf16>, vector<8x3x32xf32> -> vector<8x3x32xf32>
    %14 = tpu.iota {dimensions = array<i32: 2>} : vector<8x3x32xi32>
    %15 = tpu.iota {dimensions = array<i32: 1>} : vector<8x3x32xi32>
    %16 = vector.extract_strided_slice %2 {offsets = [0, 0], sizes = [8, 1], strides = [1, 1]} : vector<8x2xi32> to vector<8x1xi32>
    %17 = vector.shape_cast %16 : vector<8x1xi32> to vector<8x1x1xi32>
    %18 = vector.extract_strided_slice %2 {offsets = [0, 1], sizes = [8, 1], strides = [1, 1]} : vector<8x2xi32> to vector<8x1xi32>
    %19 = vector.shape_cast %18 : vector<8x1xi32> to vector<8x1x1xi32>
    %c0_i32 = arith.constant 0 : i32
    %20 = vector.broadcast %c0_i32 : i32 to vector<8x3x32xi32>
    %21 = arith.cmpi eq, %15, %20 : vector<8x3x32xi32>
    %c16_i32 = arith.constant 16 : i32
    %22 = vector.broadcast %c16_i32 : i32 to vector<8x3x32xi32>
    %23 = arith.cmpi slt, %14, %22 : vector<8x3x32xi32>
    %24 = arith.andi %21, %23 : vector<8x3x32xi1>
    %c1_i32 = arith.constant 1 : i32
    %25 = vector.broadcast %c1_i32 : i32 to vector<8x3x32xi32>
    %26 = arith.cmpi eq, %15, %25 : vector<8x3x32xi32>
    %c16_i32_9 = arith.constant 16 : i32
    %27 = vector.broadcast %c16_i32_9 : i32 to vector<8x3x32xi32>
    %28 = arith.cmpi sge, %14, %27 : vector<8x3x32xi32>
    %29 = arith.andi %26, %28 : vector<8x3x32xi1>
    %c16_i32_10 = arith.constant 16 : i32
    %30 = vector.broadcast %c16_i32_10 : i32 to vector<8x1x1xi32>
    %31 = arith.addi %30, %17 : vector<8x1x1xi32>
    %32 = vector.broadcast %31 : vector<8x1x1xi32> to vector<8x3x32xi32>
    %33 = arith.cmpi slt, %14, %32 : vector<8x3x32xi32>
    %34 = arith.andi %29, %33 : vector<8x3x32xi1>
    %c2_i32 = arith.constant 2 : i32
    %35 = vector.broadcast %c2_i32 : i32 to vector<8x3x32xi32>
    %36 = arith.cmpi eq, %15, %35 : vector<8x3x32xi32>
    %c24_i32 = arith.constant 24 : i32
    %37 = vector.broadcast %c24_i32 : i32 to vector<8x3x32xi32>
    %38 = arith.cmpi sge, %14, %37 : vector<8x3x32xi32>
    %39 = arith.andi %36, %38 : vector<8x3x32xi1>
    %c24_i32_11 = arith.constant 24 : i32
    %40 = vector.broadcast %c24_i32_11 : i32 to vector<8x1x1xi32>
    %41 = arith.addi %40, %19 : vector<8x1x1xi32>
    %42 = vector.broadcast %41 : vector<8x1x1xi32> to vector<8x3x32xi32>
    %43 = arith.cmpi slt, %14, %42 : vector<8x3x32xi32>
    %44 = arith.andi %39, %43 : vector<8x3x32xi1>
    %45 = arith.ori %24, %34 : vector<8x3x32xi1>
    %46 = arith.ori %45, %44 : vector<8x3x32xi1>
    %cst_12 = arith.constant -1.000000e+09 : f32
    %47 = vector.broadcast %cst_12 : f32 to vector<8x3x32xf32>
    %48 = arith.select %46, %13, %47 : vector<8x3x32xi1>, vector<8x3x32xf32>
    %cst_13 = arith.constant dense<0xFF800000> : vector<8x3xf32>
    %49 = vector.multi_reduction <maximumf>, %48, %cst_13 [2] : vector<8x3x32xf32> to vector<8x3xf32>
    %50 = vector.shape_cast %49 : vector<8x3xf32> to vector<8x3x1xf32>
    %51 = vector.broadcast %50 : vector<8x3x1xf32> to vector<8x3x32xf32>
    %52 = arith.subf %48, %51 : vector<8x3x32xf32>
    %53 = math.exp %52 : vector<8x3x32xf32>
    %cst_14 = arith.constant dense<0.000000e+00> : vector<8x3xf32>
    %54 = vector.multi_reduction <add>, %53, %cst_14 [2] : vector<8x3x32xf32> to vector<8x3xf32>
    %55 = vector.shape_cast %54 : vector<8x3xf32> to vector<8x3x1xf32>
    %56 = tpu.reciprocal %55 {approx = true} : vector<8x3x1xf32> -> vector<8x3x1xf32>
    %57 = vector.broadcast %56 : vector<8x3x1xf32> to vector<8x3x32xf32>
    %58 = arith.mulf %53, %57 : vector<8x3x32xf32>
    %cst_15 = arith.constant 0.000000e+00 : f32
    %59 = vector.broadcast %cst_15 : f32 to vector<8x3x32xf32>
    %60 = arith.select %46, %58, %59 : vector<8x3x32xi1>, vector<8x3x32xf32>
    %61 = arith.truncf %60 : vector<8x3x32xf32> to vector<8x3x32xbf16>
    %cst_16 = arith.constant dense<0.000000e+00> : vector<8x3x32xf32>
    %62 = tpu.matmul %61, %1, %cst_16 {dimension_numbers = #tpu.dot_dimension_numbers<[2], [1], [1], [2], [0, 0, 0, 1, 1, 2], [0], [0]>} : vector<8x3x32xbf16>, vector<8x32x32xbf16>, vector<8x3x32xf32> -> vector<8x3x32xf32>
    %63 = vector.extract_strided_slice %62 {offsets = [0, 0, 0], sizes = [8, 1, 32], strides = [1, 1, 1]} : vector<8x3x32xf32> to vector<8x1x32xf32>
    %64 = vector.shape_cast %63 : vector<8x1x32xf32> to vector<8x32xf32>
    %65 = arith.truncf %64 : vector<8x32xf32> to vector<8x32xbf16>
    %66 = vector.extract_strided_slice %62 {offsets = [0, 1, 0], sizes = [8, 1, 32], strides = [1, 1, 1]} : vector<8x3x32xf32> to vector<8x1x32xf32>
    %67 = vector.shape_cast %66 : vector<8x1x32xf32> to vector<8x32xf32>
    %68 = arith.truncf %67 : vector<8x32xf32> to vector<8x32xbf16>
    %69 = vector.extract_strided_slice %62 {offsets = [0, 2, 0], sizes = [8, 1, 32], strides = [1, 1, 1]} : vector<8x3x32xf32> to vector<8x1x32xf32>
    %70 = vector.shape_cast %69 : vector<8x1x32xf32> to vector<8x32xf32>
    %71 = arith.truncf %70 : vector<8x32xf32> to vector<8x32xbf16>
    %c0_17 = arith.constant 0 : index
    %c0_18 = arith.constant 0 : index
    %72 = vector.load %arg5[%c0_17, %c0_18] : memref<128x64xbf16, #tpu.memory_space<vmem>>, vector<32x64xbf16>
    %cst_19 = arith.constant dense<0.000000e+00> : vector<8x64xf32>
    %73 = tpu.matmul %0, %72, %cst_19 {dimension_numbers = #tpu.dot_dimension_numbers<[1], [0], [0], [1], [0, 0, 1, 1], [], []>} : vector<8x32xbf16>, vector<32x64xbf16>, vector<8x64xf32> -> vector<8x64xf32>
    %c32 = arith.constant 32 : index
    %c0_20 = arith.constant 0 : index
    %74 = vector.load %arg5[%c32, %c0_20] : memref<128x64xbf16, #tpu.memory_space<vmem>>, vector<32x64xbf16>
    %cst_21 = arith.constant dense<0.000000e+00> : vector<8x64xf32>
    %75 = tpu.matmul %65, %74, %cst_21 {dimension_numbers = #tpu.dot_dimension_numbers<[1], [0], [0], [1], [0, 0, 1, 1], [], []>} : vector<8x32xbf16>, vector<32x64xbf16>, vector<8x64xf32> -> vector<8x64xf32>
    %76 = arith.addf %73, %75 : vector<8x64xf32>
    %c64 = arith.constant 64 : index
    %c0_22 = arith.constant 0 : index
    %77 = vector.load %arg5[%c64, %c0_22] : memref<128x64xbf16, #tpu.memory_space<vmem>>, vector<32x64xbf16>
    %cst_23 = arith.constant dense<0.000000e+00> : vector<8x64xf32>
    %78 = tpu.matmul %68, %77, %cst_23 {dimension_numbers = #tpu.dot_dimension_numbers<[1], [0], [0], [1], [0, 0, 1, 1], [], []>} : vector<8x32xbf16>, vector<32x64xbf16>, vector<8x64xf32> -> vector<8x64xf32>
    %79 = arith.addf %76, %78 : vector<8x64xf32>
    %c96 = arith.constant 96 : index
    %c0_24 = arith.constant 0 : index
    %80 = vector.load %arg5[%c96, %c0_24] : memref<128x64xbf16, #tpu.memory_space<vmem>>, vector<32x64xbf16>
    %cst_25 = arith.constant dense<0.000000e+00> : vector<8x64xf32>
    %81 = tpu.matmul %71, %80, %cst_25 {dimension_numbers = #tpu.dot_dimension_numbers<[1], [0], [0], [1], [0, 0, 1, 1], [], []>} : vector<8x32xbf16>, vector<32x64xbf16>, vector<8x64xf32> -> vector<8x64xf32>
    %82 = arith.addf %79, %81 : vector<8x64xf32>
    %c0_26 = arith.constant 0 : index
    %c0_27 = arith.constant 0 : index
    %83 = vector.load %arg6[%c0_26, %c0_27] : memref<1x64xf32, #tpu.memory_space<vmem>>, vector<1x64xf32>
    %84 = vector.broadcast %83 : vector<1x64xf32> to vector<8x64xf32>
    %85 = arith.addf %82, %84 : vector<8x64xf32>
    %cst_28 = arith.constant 0.000000e+00 : f32
    %86 = vector.broadcast %cst_28 : f32 to vector<8x64xf32>
    %87 = arith.maximumf %85, %86 : vector<8x64xf32>
    %88 = arith.truncf %87 : vector<8x64xf32> to vector<8x64xbf16>
    %c0_29 = arith.constant 0 : index
    %c0_30 = arith.constant 0 : index
    %89 = vector.load %arg7[%c0_29, %c0_30] : memref<64x160xbf16, #tpu.memory_space<vmem>>, vector<64x160xbf16>
    %cst_31 = arith.constant dense<0.000000e+00> : vector<8x160xf32>
    %90 = tpu.matmul %88, %89, %cst_31 {dimension_numbers = #tpu.dot_dimension_numbers<[1], [0], [0], [1], [0, 0, 1, 1], [], []>} : vector<8x64xbf16>, vector<64x160xbf16>, vector<8x160xf32> -> vector<8x160xf32>
    %c0_32 = arith.constant 0 : index
    %c0_33 = arith.constant 0 : index
    %91 = vector.load %arg8[%c0_32, %c0_33] : memref<1x160xf32, #tpu.memory_space<vmem>>, vector<1x160xf32>
    %92 = vector.broadcast %91 : vector<1x160xf32> to vector<8x160xf32>
    %93 = arith.addf %90, %92 : vector<8x160xf32>
    %94 = vector.extract_strided_slice %93 {offsets = [0, 0], sizes = [8, 128], strides = [1, 1]} : vector<8x160xf32> to vector<8x128xf32>
    %95 = vector.extract_strided_slice %93 {offsets = [0, 128], sizes = [8, 32], strides = [1, 1]} : vector<8x160xf32> to vector<8x32xf32>
    %96 = vector.extract_strided_slice %1 {offsets = [0, 24, 0], sizes = [8, 8, 32], strides = [1, 1, 1]} : vector<8x32x32xbf16> to vector<8x8x32xbf16>
    %97 = arith.truncf %95 : vector<8x32xf32> to vector<8x32xbf16>
    %98 = vector.shape_cast %97 : vector<8x32xbf16> to vector<8x1x32xbf16>
    %cst_34 = arith.constant dense<0.000000e+00> : vector<8x1x8xf32>
    %99 = tpu.matmul %98, %96, %cst_34 {dimension_numbers = #tpu.dot_dimension_numbers<[2], [2], [1], [1], [0, 0, 0, 1, 1, 1], [0], [0]>} : vector<8x1x32xbf16>, vector<8x8x32xbf16>, vector<8x1x8xf32> -> vector<8x1x8xf32>
    %100 = vector.shape_cast %99 : vector<8x1x8xf32> to vector<8x8xf32>
    %101 = tpu.iota {dimensions = array<i32: 1>} : vector<8x8xi32>
    %102 = vector.extract_strided_slice %2 {offsets = [0, 1], sizes = [8, 1], strides = [1, 1]} : vector<8x2xi32> to vector<8x1xi32>
    %103 = vector.broadcast %102 : vector<8x1xi32> to vector<8x8xi32>
    %104 = arith.cmpi slt, %101, %103 : vector<8x8xi32>
    %cst_35 = arith.constant -1.000000e+09 : f32
    %105 = vector.broadcast %cst_35 : f32 to vector<8x8xf32>
    %106 = arith.select %104, %100, %105 : vector<8x8xi1>, vector<8x8xf32>
    %107 = tpu.iota {dimensions = array<i32: 0>} : vector<8x128xi32>
    %108 = tpu.iota {dimensions = array<i32: 1>} : vector<8x128xi32>
    %c41_i32 = arith.constant 41 : i32
    %109 = vector.broadcast %c41_i32 : i32 to vector<8x128xi32>
    %110 = arith.addi %107, %109 : vector<8x128xi32>
    %111 = arith.cmpi eq, %108, %110 : vector<8x128xi32>
    %112 = arith.extui %111 : vector<8x128xi1> to vector<8x128xi32>
    %113 = arith.sitofp %112 : vector<8x128xi32> to vector<8x128xf32>
    %cst_36 = arith.constant dense<0.000000e+00> : vector<8x128xf32>
    %114 = tpu.matmul %106, %113, %cst_36 {dimension_numbers = #tpu.dot_dimension_numbers<[1], [0], [0], [1], [0, 0, 1, 1], [], []>} : vector<8x8xf32>, vector<8x128xf32>, vector<8x128xf32> -> vector<8x128xf32>
    %115 = arith.addf %94, %114 : vector<8x128xf32>
    %cst_37 = arith.constant dense<0xFF800000> : vector<8xf32>
    %116 = vector.multi_reduction <maximumf>, %115, %cst_37 [1] : vector<8x128xf32> to vector<8xf32>
    %117 = vector.shape_cast %116 : vector<8xf32> to vector<8x1xf32>
    %118 = vector.broadcast %117 : vector<8x1xf32> to vector<8x128xf32>
    %119 = arith.subf %115, %118 : vector<8x128xf32>
    %120 = math.exp %119 : vector<8x128xf32>
    %cst_38 = arith.constant dense<0.000000e+00> : vector<8xf32>
    %121 = vector.multi_reduction <add>, %120, %cst_38 [1] : vector<8x128xf32> to vector<8xf32>
    %122 = vector.shape_cast %121 : vector<8xf32> to vector<8x1xf32>
    %cst_39 = arith.constant 1.000000e+00 : f32
    %123 = vector.broadcast %cst_39 : f32 to vector<8x1xf32>
    %124 = arith.divf %123, %122 : vector<8x1xf32>
    %125 = vector.broadcast %124 : vector<8x1xf32> to vector<8x128xf32>
    %126 = arith.mulf %120, %125 : vector<8x128xf32>
    %c0_40 = arith.constant 0 : index
    %c0_41 = arith.constant 0 : index
    %127 = vector.load %arg9[%c0_40, %c0_41] : memref<8x128xf32, #tpu.memory_space<vmem>>, vector<8x128xf32>
    tpu.vector_store %arg9[%c0_40, %c0_41], %126 {strides = array<i32>} : memref<8x128xf32, #tpu.memory_space<vmem>>, vector<8x128xf32>,
    return
  }
  func.func @transform_0(%arg0: i32) -> (i32, i32) {
    %c0_i32 = arith.constant 0 : i32
    %c0_i32_0 = arith.constant 0 : i32
    return %arg0, %c0_i32 : i32, i32
  }
  func.func @transform_1(%arg0: i32) -> (i32, i32, i32) {
    %c0_i32 = arith.constant 0 : i32
    %c0_i32_0 = arith.constant 0 : i32
    %c0_i32_1 = arith.constant 0 : i32
    return %arg0, %c0_i32, %c0_i32_0 : i32, i32, i32
  }
  func.func @transform_2(%arg0: i32) -> (i32, i32) {
    %c0_i32 = arith.constant 0 : i32
    %c0_i32_0 = arith.constant 0 : i32
    return %arg0, %c0_i32 : i32, i32
  }
  func.func @transform_3(%arg0: i32) -> (i32, i32) {
    %c0_i32 = arith.constant 0 : i32
    %c0_i32_0 = arith.constant 0 : i32
    %c0_i32_1 = arith.constant 0 : i32
    return %c0_i32, %c0_i32_0 : i32, i32
  }
  func.func @transform_4(%arg0: i32) -> (i32, i32) {
    %c0_i32 = arith.constant 0 : i32
    %c0_i32_0 = arith.constant 0 : i32
    %c0_i32_1 = arith.constant 0 : i32
    return %c0_i32, %c0_i32_0 : i32, i32
  }
  func.func @transform_5(%arg0: i32) -> (i32, i32) {
    %c0_i32 = arith.constant 0 : i32
    %c0_i32_0 = arith.constant 0 : i32
    %c0_i32_1 = arith.constant 0 : i32
    return %c0_i32, %c0_i32_0 : i32, i32
  }
  func.func @transform_6(%arg0: i32) -> (i32, i32) {
    %c0_i32 = arith.constant 0 : i32
    %c0_i32_0 = arith.constant 0 : i32
    %c0_i32_1 = arith.constant 0 : i32
    return %c0_i32, %c0_i32_0 : i32, i32
  }
  func.func @transform_7(%arg0: i32) -> (i32, i32) {
    %c0_i32 = arith.constant 0 : i32
    %c0_i32_0 = arith.constant 0 : i32
    %c0_i32_1 = arith.constant 0 : i32
    return %c0_i32, %c0_i32_0 : i32, i32
  }
  func.func @transform_8(%arg0: i32) -> (i32, i32) {
    %c0_i32 = arith.constant 0 : i32
    %c0_i32_0 = arith.constant 0 : i32
    return %arg0, %c0_i32 : i32, i32
  }
}

</mosaic_0001>

<llo_original>
// kernel: tpu_custom_call.1
$region0: #{tpu_custom_call.1}
  #allocation0 [shape = 'u32[]', space=smem, size = 0x4, offset = 0x4, fixed_abs, tag = 'smem constant byte address 0x4 - core index']
  #allocation1 [shape = 'u32[144,128]{1,0:T(1,128)}', space=vmem, size = 0x12000, scoped, tag = 'internal scratch']
  %s0 = inlined_call_operand.vmem [shape: bf16[8,32], index: 0, kind: input, shape index: {}]
  %s1 = inlined_call_operand.hbm [shape: bf16[8,32,32], index: 1, kind: input, shape index: {}]
  %s2 = inlined_call_operand.vmem [shape: s32[8,2], index: 2, kind: input, shape index: {}]
  %s3 = inlined_call_operand.vmem [shape: bf16[32,96], index: 3, kind: input, shape index: {}]
  %s4 = inlined_call_operand.vmem [shape: bf16[128,64], index: 4, kind: input, shape index: {}]
  %s5 = inlined_call_operand.vmem [shape: f32[1,64], index: 5, kind: input, shape index: {}]
  %s6 = inlined_call_operand.vmem [shape: bf16[64,160], index: 6, kind: input, shape index: {}]
  %s7 = inlined_call_operand.vmem [shape: f32[1,160], index: 7, kind: input, shape index: {}]
  %s8 = inlined_call_operand.hbm [shape: f32[8,128], index: 8, kind: output, shape index: {}]
  %s9 = sld [smem:[#allocation0]]
  $region46: #{tpu_custom_call.1} parent=0
    _
  %s11 = ssub.s32 1, %s9
  %s12 = scalar_select 0, %s11, %s9
  $region1: #{tpu_custom_call.1} parent=0
    #allocation2 [shape = 'u8[65536]{0}', space=vmem, size = 0x10000, scoped, tag = 'input window, operand 1, single buffered']
    #allocation3 [shape = 's32[1]{0}', space=sflag, size = 0x4, scoped, tag = 'scoped memory for tpu_custom_call.1']
    #allocation4 [shape = 's32[1]{0}', space=sflag, size = 0x4, scoped, tag = 'scoped memory for tpu_custom_call.1']
    #allocation5 [shape = 'u8[4096]{0}', space=vmem, size = 0x1000, scoped, tag = 'output window, operand 0, single buffered']
    %13 = vsyncpa [#allocation3], 0
    %14 = vsyncpa [#allocation4], 0
    // Predicated region
    $region2: #{tpu_custom_call.1} parent=1 // pred_check
      _
    $region3: #{tpu_custom_call.1} parent=1 // pred_check_branch
      %16 = sbr.rel (0) target = $region5
    $region4: #{tpu_custom_call.1} parent=1 // pred_region
      _
    $region5: #{tpu_custom_call.1} parent=1 // pred_fallthru
      _
    // Predicated region
    $region6: #{tpu_custom_call.1} parent=1 // pred_check
      _
    $region7: #{tpu_custom_call.1} parent=1 // pred_check_branch
      %18 = sbr.rel (0) target = $region9
    $region8: #{tpu_custom_call.1} parent=1 // pred_region
      %s20 = ssub.s32 2048, 2048
      %21 = vsyncadd [#allocation3], %s20
      %s22 = sshll.u32 [#allocation2], 4
      %s23 = int_to_ptr.vmem [resolvable:$true] %s22
      %28 = dma.hbm_to_vmem [thread:$0]  %s1, 2048, %s23, [#allocation3], 64, 64, 4
    $region9: #{tpu_custom_call.1} parent=1 // pred_fallthru
      _
    // Predicated region
    $region10: #{tpu_custom_call.1} parent=1 // pred_check
      _
    $region11: #{tpu_custom_call.1} parent=1 // pred_check_branch
      %30 = sbr.rel (0) target = $region13
    $region12: #{tpu_custom_call.1} parent=1 // pred_region
      _
    $region13: #{tpu_custom_call.1} parent=1 // pred_fallthru
      _
    // Predicated region
    $region14: #{tpu_custom_call.1} parent=1 // pred_check
      _
    $region15: #{tpu_custom_call.1} parent=1 // pred_check_branch
      %32 = sbr.rel (0) target = $region17
    $region16: #{tpu_custom_call.1} parent=1 // pred_region
      _
    $region17: #{tpu_custom_call.1} parent=1 // pred_fallthru
      _
    // Predicated region
    $region18: #{tpu_custom_call.1} parent=1 // pred_check
      _
    $region19: #{tpu_custom_call.1} parent=1 // pred_check_branch
      %34 = sbr.rel (0) target = $region21
    $region20: #{tpu_custom_call.1} parent=1 // pred_region
      _
    $region21: #{tpu_custom_call.1} parent=1 // pred_fallthru
      _
    // Predicated region
    $region22: #{tpu_custom_call.1} parent=1 // pred_check
      _
    $region23: #{tpu_custom_call.1} parent=1 // pred_check_branch
      %36 = sbr.rel (0) target = $region25
    $region24: #{tpu_custom_call.1} parent=1 // pred_region
      _
    $region25: #{tpu_custom_call.1} parent=1 // pred_fallthru
      _
    // Predicated region
    $region26: #{tpu_custom_call.1} parent=1 // pred_check
      _
    $region27: #{tpu_custom_call.1} parent=1 // pred_check_branch
      %38 = sbr.rel (0) target = $region29
    $region28: #{tpu_custom_call.1} parent=1 // pred_region
      _
    $region29: #{tpu_custom_call.1} parent=1 // pred_fallthru
      _
    // Predicated region
    $region30: #{tpu_custom_call.1} parent=1 // pred_check
      _
    $region31: #{tpu_custom_call.1} parent=1 // pred_check_branch
      %40 = sbr.rel (0) target = $region33
    $region32: #{tpu_custom_call.1} parent=1 // pred_region
      _
    $region33: #{tpu_custom_call.1} parent=1 // pred_fallthru
      _
    // Predicated region
    $region34: #{tpu_custom_call.1} parent=1 // pred_check
      _
    $region35: #{tpu_custom_call.1} parent=1 // pred_check_branch
      %42 = sbr.rel (0) target = $region37
    $region36: #{tpu_custom_call.1} parent=1 // pred_region
      %43 = dma.done [#allocation3], 2048
    $region37: #{tpu_custom_call.1} parent=1 // pred_fallthru
      _
    %v45 = vld [vmem:[%s0] sm:$0xf]
    %v46 = vld [vmem:[#allocation2] sm:$0xf]
    %v47 = vld [vmem:[#allocation2 + $0x4] sm:$0xf]
    %v48 = vld [vmem:[#allocation2 + $0x8] sm:$0xf]
    %v49 = vld [vmem:[#allocation2 + $0xc] sm:$0xf]
    %v50 = vld [vmem:[#allocation2 + $0x10] sm:$0xf]
    %v51 = vld [vmem:[#allocation2 + $0x14] sm:$0xf]
    %v52 = vld [vmem:[#allocation2 + $0x18] sm:$0xf]
    %v53 = vld [vmem:[#allocation2 + $0x1c] sm:$0xf]
    %v54 = vld [vmem:[#allocation2 + $0x20] sm:$0xf]
    %v55 = vld [vmem:[#allocation2 + $0x24] sm:$0xf]
    %v56 = vld [vmem:[#allocation2 + $0x28] sm:$0xf]
    %v57 = vld [vmem:[#allocation2 + $0x2c] sm:$0xf]
    %v58 = vld [vmem:[#allocation2 + $0x30] sm:$0xf]
    %v59 = vld [vmem:[#allocation2 + $0x34] sm:$0xf]
    %v60 = vld [vmem:[#allocation2 + $0x38] sm:$0xf]
    %v61 = vld [vmem:[#allocation2 + $0x3c] sm:$0xf]
    %v62 = vld [vmem:[#allocation2 + $0x40] sm:$0xf]
    %v63 = vld [vmem:[#allocation2 + $0x44] sm:$0xf]
    %v64 = vld [vmem:[#allocation2 + $0x48] sm:$0xf]
    %v65 = vld [vmem:[#allocation2 + $0x4c] sm:$0xf]
    %v66 = vld [vmem:[#allocation2 + $0x50] sm:$0xf]
    %v67 = vld [vmem:[#allocation2 + $0x54] sm:$0xf]
    %v68 = vld [vmem:[#allocation2 + $0x58] sm:$0xf]
    %v69 = vld [vmem:[#allocation2 + $0x5c] sm:$0xf]
    %v70 = vld [vmem:[#allocation2 + $0x60] sm:$0xf]
    %v71 = vld [vmem:[#allocation2 + $0x64] sm:$0xf]
    %v72 = vld [vmem:[#allocation2 + $0x68] sm:$0xf]
    %v73 = vld [vmem:[#allocation2 + $0x6c] sm:$0xf]
    %v74 = vld [vmem:[#allocation2 + $0x70] sm:$0xf]
    %v75 = vld [vmem:[#allocation2 + $0x74] sm:$0xf]
    %v76 = vld [vmem:[#allocation2 + $0x78] sm:$0xf]
    %v77 = vld [vmem:[#allocation2 + $0x7c] sm:$0xf]
    %v78 = vld [vmem:[%s2] sm:$0xff]
    %v79 = vld [vmem:[%s3] sm:$0xf]
    %v80 = vld [vmem:[%s3 + $0x4] sm:$0xf]
    %v81 = vld [vmem:[%s3 + $0x8] sm:$0xf]
    %v82 = vld [vmem:[%s3 + $0xc] sm:$0xf]
    %v87 = vunpack.c.l.b16 %v79
    %v88 = vunpack.c.l.b16 %v80
    %v89 = vunpack.c.l.b16 %v81
    %v90 = vunpack.c.l.b16 %v82
    %v91 = vpack.c.b16 %v88, %v87
    %v92 = vpack.c.b16 %v90, %v89
    %vm95 = vcmask 261120
    %v97 = vsel %vm95, %v45, 0
    %99 = vmatprep.subr.bf16.mxu0 0
    %100 = vmatpush1.bf16.msra.mxu0 0
    %101 = vmatprep.subr.bf16.mxu0 0
    %102 = vmatpush1.bf16.msra.mxu0 0
    %103 = vmatprep.subr.bf16.mxu0 0
    %104 = vmatpush1.bf16.msra.mxu0 0
    %105 = vmatprep.subr.bf16.mxu0 0
    %106 = vmatpush1.bf16.msra.mxu0 0
    %107 = vmatprep.subr.bf16.mxu0 0
    %108 = vmatpush1.bf16.msra.mxu0 0
    %109 = vmatprep.subr.bf16.mxu0 0
    %110 = vmatpush1.bf16.msra.mxu0 0
    %111 = vmatprep.subr.bf16.mxu0 0
    %112 = vmatpush1.bf16.msra.mxu0 %v92
    %113 = vmatprep.subr.bf16.mxu0 0
    %114 = vmatpush1.bf16.msra.mxu0 %v91
    %115 = vmatprep.subr.bf16.mxu0 0
    %116 = vmatpush2.bf16.msra.mxu0 0
    %117 = vmatprep.subr.bf16.mxu0 0
    %118 = vmatpush2.bf16.msra.mxu0 0
    %119 = vmatprep.subr.bf16.mxu0 0
    %120 = vmatpush2.bf16.msra.mxu0 0
    %121 = vmatprep.subr.bf16.mxu0 0
    %122 = vmatpush2.bf16.msra.mxu0 0
    %123 = vmatprep.subr.bf16.mxu0 0
    %124 = vmatpush2.bf16.msra.mxu0 0
    %125 = vmatprep.subr.bf16.mxu0 0
    %126 = vmatpush2.bf16.msra.mxu0 0
    %127 = vmatprep.subr.bf16.mxu0 0
    %128 = vmatpush2.bf16.msra.mxu0 0
    %129 = vmatprep.subr.bf16.mxu0 0
    %130 = vmatpush2.bf16.msra.mxu0 0
    %131 = vmatprep.mubr.bf16.mxu0 0
    %132 = vmatmul.mubr.bf16.gmra.mxu0 %v97
    %v133 = vpop.f32.mrf.mxu0
    %v134 = vadd.f32 0.0, %v133
    %v135 = vpop.f32.mrf.mxu0
    %v136 = vpop.f32.mrf.mxu0
    %v137 = vpop.f32.mrf.mxu0
    %138 = vdwg.mxu0
    %v140 = vcombine.high %v134, %v134
    %v142 = vunpack.c.l.s4 1966171168
    %v143 = vunpack.c.0.s8 %v142
    %v144 = vlaneseq
    %v145 = vshrl.u32 %v144, 7
    %v146 = vsub.s32 %v143, %v145
    %v147 = vrot.slane %v134, %v146
    %v149 = vunpack.c.l.s4 1966171168
    %v150 = vunpack.c.0.s8 %v149
    %v151 = vlaneseq
    %v152 = vshrl.u32 %v151, 7
    %v153 = vsub.s32 %v150, %v152
    %v154 = vrot.slane %v140, %v153
    %v155 = vcombine.high %v147, %v147
    %v156 = vcombine.high %v154, %v154
    %v158 = vunpack.c.l.s4 1966171168
    %v159 = vunpack.c.0.s8 %v158
    %v160 = vlaneseq
    %v161 = vshrl.u32 %v160, 7
    %v162 = vsub.s32 %v159, %v161
    %v163 = vrot.slane %v147, %v162
    %v165 = vunpack.c.l.s4 1966171168
    %v166 = vunpack.c.0.s8 %v165
    %v167 = vlaneseq
    %v168 = vshrl.u32 %v167, 7
    %v169 = vsub.s32 %v166, %v168
    %v170 = vrot.slane %v154, %v169
    %v172 = vunpack.c.l.s4 1966171168
    %v173 = vunpack.c.0.s8 %v172
    %v174 = vlaneseq
    %v175 = vshrl.u32 %v174, 7
    %v176 = vsub.s32 %v173, %v175
    %v177 = vrot.slane %v155, %v176
    %v179 = vunpack.c.l.s4 1966171168
    %v180 = vunpack.c.0.s8 %v179
    %v181 = vlaneseq
    %v182 = vshrl.u32 %v181, 7
    %v183 = vsub.s32 %v180, %v182
    %v184 = vrot.slane %v156, %v183
    %v185 = vcombine.high %v163, %v163
    %v186 = vcombine.high %v170, %v170
    %v187 = vcombine.high %v177, %v177
    %v188 = vcombine.high %v184, %v184
    %v197 = vlaneseq
    %v198 = vshrl.u32 %v197, 7
    %v199 = vsub.s32 0, %v198
    %v200 = vrot.slane %v163, %v199
    %v201 = vlaneseq
    %v202 = vshrl.u32 %v201, 7
    %v203 = vsub.s32 0, %v202
    %v204 = vrot.slane %v177, %v203
    %v205 = vlaneseq
    %v206 = vshrl.u32 %v205, 7
    %v207 = vsub.s32 0, %v206
    %v208 = vrot.slane %v185, %v207
    %v209 = vlaneseq
    %v210 = vshrl.u32 %v209, 7
    %v211 = vsub.s32 0, %v210
    %v212 = vrot.slane %v187, %v211
    %v213 = vlaneseq
    %v214 = vshrl.u32 %v213, 7
    %v215 = vsub.s32 0, %v214
    %v216 = vrot.slane %v170, %v215
    %v217 = vlaneseq
    %v218 = vshrl.u32 %v217, 7
    %v219 = vsub.s32 0, %v218
    %v220 = vrot.slane %v184, %v219
    %v221 = vlaneseq
    %v222 = vshrl.u32 %v221, 7
    %v223 = vsub.s32 0, %v222
    %v224 = vrot.slane %v186, %v223
    %v225 = vlaneseq
    %v226 = vshrl.u32 %v225, 7
    %v227 = vsub.s32 0, %v226
    %v228 = vrot.slane %v188, %v227
    %229 = vrot.lane.b32.xlu0 %v200, 96
    %v230 = vpop.permute.xlu0 %229
    %231 = vrot.lane.b32.xlu0 %v204, 96
    %v232 = vpop.permute.xlu0 %231
    %233 = vrot.lane.b32.xlu0 %v208, 96
    %v234 = vpop.permute.xlu0 %233
    %235 = vrot.lane.b32.xlu0 %v212, 96
    %v236 = vpop.permute.xlu0 %235
    %237 = vrot.lane.b32.xlu0 %v216, 96
    %v238 = vpop.permute.xlu0 %237
    %239 = vrot.lane.b32.xlu0 %v220, 96
    %v240 = vpop.permute.xlu0 %239
    %241 = vrot.lane.b32.xlu0 %v224, 96
    %v242 = vpop.permute.xlu0 %241
    %243 = vrot.lane.b32.xlu0 %v228, 96
    %v244 = vpop.permute.xlu0 %243
    %253 = vrot.lane.b32.xlu0 %v200, 64
    %v254 = vpop.permute.xlu0 %253
    %255 = vrot.lane.b32.xlu0 %v204, 64
    %v256 = vpop.permute.xlu0 %255
    %257 = vrot.lane.b32.xlu0 %v208, 64
    %v258 = vpop.permute.xlu0 %257
    %259 = vrot.lane.b32.xlu0 %v212, 64
    %v260 = vpop.permute.xlu0 %259
    %261 = vrot.lane.b32.xlu0 %v216, 64
    %v262 = vpop.permute.xlu0 %261
    %263 = vrot.lane.b32.xlu0 %v220, 64
    %v264 = vpop.permute.xlu0 %263
    %265 = vrot.lane.b32.xlu0 %v224, 64
    %v266 = vpop.permute.xlu0 %265
    %267 = vrot.lane.b32.xlu0 %v228, 64
    %v268 = vpop.permute.xlu0 %267
    %vm277 = vcmask 1040384
    %v278 = vsel %vm277, %v163, %v230
    %v279 = vsel %vm277, %v177, %v232
    %v280 = vsel %vm277, %v185, %v234
    %v281 = vsel %vm277, %v187, %v236
    %v282 = vsel %vm277, %v170, %v238
    %v283 = vsel %vm277, %v184, %v240
    %v284 = vsel %vm277, %v186, %v242
    %v285 = vsel %vm277, %v188, %v244
    %vm286 = vcmask 1041408
    %v287 = vsel %vm286, %v278, %v254
    %v288 = vsel %vm286, %v279, %v256
    %v289 = vsel %vm286, %v280, %v258
    %v290 = vsel %vm286, %v281, %v260
    %v291 = vsel %vm286, %v282, %v262
    %v292 = vsel %vm286, %v283, %v264
    %v293 = vsel %vm286, %v284, %v266
    %v294 = vsel %vm286, %v285, %v268
    %v295 = vpack.c.bf16 %v287, %v287
    %v296 = vpack.c.bf16 %v288, %v288
    %v297 = vpack.c.bf16 %v289, %v289
    %v298 = vpack.c.bf16 %v290, %v290
    %v299 = vpack.c.bf16 %v291, %v291
    %v300 = vpack.c.bf16 %v292, %v292
    %v301 = vpack.c.bf16 %v293, %v293
    %v302 = vpack.c.bf16 %v294, %v294
    %v307 = vunpack.c.l.b16 %v46
    %v308 = vunpack.c.l.b16 %v47
    %v309 = vunpack.c.l.b16 %v48
    %v310 = vunpack.c.l.b16 %v49
    %v311 = vpack.c.b16 %v308, %v307
    %v312 = vpack.c.b16 %v310, %v309
    %v314 = vsel %vm95, %v295, 0
    %v317 = vsel %vm95, %v311, 0
    %v320 = vsel %vm95, %v312, 0
    %322 = vmatprep.subr.bf16.mxu0 0
    %323 = vmatpush1.bf16.xpose.msra.mxu0 0
    %324 = vmatprep.subr.bf16.mxu0 0
    %325 = vmatpush1.bf16.xpose.msra.mxu0 0
    %326 = vmatprep.subr.bf16.mxu0 0
    %327 = vmatpush1.bf16.xpose.msra.mxu0 0
    %328 = vmatprep.subr.bf16.mxu0 0
    %329 = vmatpush1.bf16.xpose.msra.mxu0 0
    %330 = vmatprep.subr.bf16.mxu0 0
    %331 = vmatpush1.bf16.xpose.msra.mxu0 0
    %332 = vmatprep.subr.bf16.mxu0 0
    %333 = vmatpush1.bf16.xpose.msra.mxu0 0
    %334 = vmatprep.subr.bf16.mxu0 0
    %335 = vmatpush1.bf16.xpose.msra.mxu0 %v320
    %336 = vmatprep.subr.bf16.mxu0 0
    %337 = vmatpush1.bf16.xpose.msra.mxu0 %v317
    %338 = vmatprep.subr.bf16.mxu0 0
    %339 = vmatpush2.bf16.xpose.msra.mxu0 0
    %340 = vmatprep.subr.bf16.mxu0 0
    %341 = vmatpush2.bf16.xpose.msra.mxu0 0
    %342 = vmatprep.subr.bf16.mxu0 0
    %343 = vmatpush2.bf16.xpose.msra.mxu0 0
    %344 = vmatprep.subr.bf16.mxu0 0
    %345 = vmatpush2.bf16.xpose.msra.mxu0 0
    %346 = vmatprep.subr.bf16.mxu0 0
    %347 = vmatpush2.bf16.xpose.msra.mxu0 0
    %348 = vmatprep.subr.bf16.mxu0 0
    %349 = vmatpush2.bf16.xpose.msra.mxu0 0
    %350 = vmatprep.subr.bf16.mxu0 0
    %351 = vmatpush2.bf16.xpose.msra.mxu0 0
    %352 = vmatprep.subr.bf16.mxu0 0
    %353 = vmatpush2.bf16.xpose.msra.mxu0 0
    %354 = vmatprep.mubr.bf16.mxu0 0
    %355 = vmatmul.mubr.bf16.gmra.mxu0 %v314
    %v356 = vpop.f32.mrf.mxu0
    %v357 = vadd.f32 0.0, %v356
    %v358 = vpop.f32.mrf.mxu0
    %v359 = vpop.f32.mrf.mxu0
    %v360 = vpop.f32.mrf.mxu0
    %361 = vdwg.mxu0
    %v366 = vunpack.c.l.b16 %v50
    %v367 = vunpack.c.l.b16 %v51
    %v368 = vunpack.c.l.b16 %v52
    %v369 = vunpack.c.l.b16 %v53
    %v370 = vpack.c.b16 %v367, %v366
    %v371 = vpack.c.b16 %v369, %v368
    %v373 = vsel %vm95, %v296, 0
    %v376 = vsel %vm95, %v370, 0
    %v379 = vsel %vm95, %v371, 0
    %381 = vmatprep.subr.bf16.mxu0 0
    %382 = vmatpush1.bf16.xpose.msra.mxu0 0
    %383 = vmatprep.subr.bf16.mxu0 0
    %384 = vmatpush1.bf16.xpose.msra.mxu0 0
    %385 = vmatprep.subr.bf16.mxu0 0
    %386 = vmatpush1.bf16.xpose.msra.mxu0 0
    %387 = vmatprep.subr.bf16.mxu0 0
    %388 = vmatpush1.bf16.xpose.msra.mxu0 0
    %389 = vmatprep.subr.bf16.mxu0 0
    %390 = vmatpush1.bf16.xpose.msra.mxu0 0
    %391 = vmatprep.subr.bf16.mxu0 0
    %392 = vmatpush1.bf16.xpose.msra.mxu0 0
    %393 = vmatprep.subr.bf16.mxu0 0
    %394 = vmatpush1.bf16.xpose.msra.mxu0 %v379
    %395 = vmatprep.subr.bf16.mxu0 0
    %396 = vmatpush1.bf16.xpose.msra.mxu0 %v376
    %397 = vmatprep.subr.bf16.mxu0 0
    %398 = vmatpush2.bf16.xpose.msra.mxu0 0
    %399 = vmatprep.subr.bf16.mxu0 0
    %400 = vmatpush2.bf16.xpose.msra.mxu0 0
    %401 = vmatprep.subr.bf16.mxu0 0
    %402 = vmatpush2.bf16.xpose.msra.mxu0 0
    %403 = vmatprep.subr.bf16.mxu0 0
    %404 = vmatpush2.bf16.xpose.msra.mxu0 0
    %405 = vmatprep.subr.bf16.mxu0 0
    %406 = vmatpush2.bf16.xpose.msra.mxu0 0
    %407 = vmatprep.subr.bf16.mxu0 0
    %408 = vmatpush2.bf16.xpose.msra.mxu0 0
    %409 = vmatprep.subr.bf16.mxu0 0
    %410 = vmatpush2.bf16.xpose.msra.mxu0 0
    %411 = vmatprep.subr.bf16.mxu0 0
    %412 = vmatpush2.bf16.xpose.msra.mxu0 0
    %413 = vmatprep.mubr.bf16.mxu0 0
    %414 = vmatmul.mubr.bf16.gmra.mxu0 %v373
    %v415 = vpop.f32.mrf.mxu0
    %v416 = vadd.f32 0.0, %v415
    %v417 = vpop.f32.mrf.mxu0
    %v418 = vpop.f32.mrf.mxu0
    %v419 = vpop.f32.mrf.mxu0
    %420 = vdwg.mxu0
    %v425 = vunpack.c.l.b16 %v54
    %v426 = vunpack.c.l.b16 %v55
    %v427 = vunpack.c.l.b16 %v56
    %v428 = vunpack.c.l.b16 %v57
    %v429 = vpack.c.b16 %v426, %v425
    %v430 = vpack.c.b16 %v428, %v427
    %v432 = vsel %vm95, %v297, 0
    %v435 = vsel %vm95, %v429, 0
    %v438 = vsel %vm95, %v430, 0
    %440 = vmatprep.subr.bf16.mxu0 0
    %441 = vmatpush1.bf16.xpose.msra.mxu0 0
    %442 = vmatprep.subr.bf16.mxu0 0
    %443 = vmatpush1.bf16.xpose.msra.mxu0 0
    %444 = vmatprep.subr.bf16.mxu0 0
    %445 = vmatpush1.bf16.xpose.msra.mxu0 0
    %446 = vmatprep.subr.bf16.mxu0 0
    %447 = vmatpush1.bf16.xpose.msra.mxu0 0
    %448 = vmatprep.subr.bf16.mxu0 0
    %449 = vmatpush1.bf16.xpose.msra.mxu0 0
    %450 = vmatprep.subr.bf16.mxu0 0
    %451 = vmatpush1.bf16.xpose.msra.mxu0 0
    %452 = vmatprep.subr.bf16.mxu0 0
    %453 = vmatpush1.bf16.xpose.msra.mxu0 %v438
    %454 = vmatprep.subr.bf16.mxu0 0
    %455 = vmatpush1.bf16.xpose.msra.mxu0 %v435
    %456 = vmatprep.subr.bf16.mxu0 0
    %457 = vmatpush2.bf16.xpose.msra.mxu0 0
    %458 = vmatprep.subr.bf16.mxu0 0
    %459 = vmatpush2.bf16.xpose.msra.mxu0 0
    %460 = vmatprep.subr.bf16.mxu0 0
    %461 = vmatpush2.bf16.xpose.msra.mxu0 0
    %462 = vmatprep.subr.bf16.mxu0 0
    %463 = vmatpush2.bf16.xpose.msra.mxu0 0
    %464 = vmatprep.subr.bf16.mxu0 0
    %465 = vmatpush2.bf16.xpose.msra.mxu0 0
    %466 = vmatprep.subr.bf16.mxu0 0
    %467 = vmatpush2.bf16.xpose.msra.mxu0 0
    %468 = vmatprep.subr.bf16.mxu0 0
    %469 = vmatpush2.bf16.xpose.msra.mxu0 0
    %470 = vmatprep.subr.bf16.mxu0 0
    %471 = vmatpush2.bf16.xpose.msra.mxu0 0
    %472 = vmatprep.mubr.bf16.mxu0 0
    %473 = vmatmul.mubr.bf16.gmra.mxu0 %v432
    %v474 = vpop.f32.mrf.mxu0
    %v475 = vadd.f32 0.0, %v474
    %v476 = vpop.f32.mrf.mxu0
    %v477 = vpop.f32.mrf.mxu0
    %v478 = vpop.f32.mrf.mxu0
    %479 = vdwg.mxu0
    %v484 = vunpack.c.l.b16 %v58
    %v485 = vunpack.c.l.b16 %v59
    %v486 = vunpack.c.l.b16 %v60
    %v487 = vunpack.c.l.b16 %v61
    %v488 = vpack.c.b16 %v485, %v484
    %v489 = vpack.c.b16 %v487, %v486
    %v491 = vsel %vm95, %v298, 0
    %v494 = vsel %vm95, %v488, 0
    %v497 = vsel %vm95, %v489, 0
    %499 = vmatprep.subr.bf16.mxu0 0
    %500 = vmatpush1.bf16.xpose.msra.mxu0 0
    %501 = vmatprep.subr.bf16.mxu0 0
    %502 = vmatpush1.bf16.xpose.msra.mxu0 0
    %503 = vmatprep.subr.bf16.mxu0 0
    %504 = vmatpush1.bf16.xpose.msra.mxu0 0
    %505 = vmatprep.subr.bf16.mxu0 0
    %506 = vmatpush1.bf16.xpose.msra.mxu0 0
    %507 = vmatprep.subr.bf16.mxu0 0
    %508 = vmatpush1.bf16.xpose.msra.mxu0 0
    %509 = vmatprep.subr.bf16.mxu0 0
    %510 = vmatpush1.bf16.xpose.msra.mxu0 0
    %511 = vmatprep.subr.bf16.mxu0 0
    %512 = vmatpush1.bf16.xpose.msra.mxu0 %v497
    %513 = vmatprep.subr.bf16.mxu0 0
    %514 = vmatpush1.bf16.xpose.msra.mxu0 %v494
    %515 = vmatprep.subr.bf16.mxu0 0
    %516 = vmatpush2.bf16.xpose.msra.mxu0 0
    %517 = vmatprep.subr.bf16.mxu0 0
    %518 = vmatpush2.bf16.xpose.msra.mxu0 0
    %519 = vmatprep.subr.bf16.mxu0 0
    %520 = vmatpush2.bf16.xpose.msra.mxu0 0
    %521 = vmatprep.subr.bf16.mxu0 0
    %522 = vmatpush2.bf16.xpose.msra.mxu0 0
    %523 = vmatprep.subr.bf16.mxu0 0
    %524 = vmatpush2.bf16.xpose.msra.mxu0 0
    %525 = vmatprep.subr.bf16.mxu0 0
    %526 = vmatpush2.bf16.xpose.msra.mxu0 0
    %527 = vmatprep.subr.bf16.mxu0 0
    %528 = vmatpush2.bf16.xpose.msra.mxu0 0
    %529 = vmatprep.subr.bf16.mxu0 0
    %530 = vmatpush2.bf16.xpose.msra.mxu0 0
    %531 = vmatprep.mubr.bf16.mxu0 0
    %532 = vmatmul.mubr.bf16.gmra.mxu0 %v491
    %v533 = vpop.f32.mrf.mxu0
    %v534 = vadd.f32 0.0, %v533
    %v535 = vpop.f32.mrf.mxu0
    %v536 = vpop.f32.mrf.mxu0
    %v537 = vpop.f32.mrf.mxu0
    %538 = vdwg.mxu0
    %v543 = vunpack.c.l.b16 %v62
    %v544 = vunpack.c.l.b16 %v63
    %v545 = vunpack.c.l.b16 %v64
    %v546 = vunpack.c.l.b16 %v65
    %v547 = vpack.c.b16 %v544, %v543
    %v548 = vpack.c.b16 %v546, %v545
    %v550 = vsel %vm95, %v299, 0
    %v553 = vsel %vm95, %v547, 0
    %v556 = vsel %vm95, %v548, 0
    %558 = vmatprep.subr.bf16.mxu0 0
    %559 = vmatpush1.bf16.xpose.msra.mxu0 0
    %560 = vmatprep.subr.bf16.mxu0 0
    %561 = vmatpush1.bf16.xpose.msra.mxu0 0
    %562 = vmatprep.subr.bf16.mxu0 0
    %563 = vmatpush1.bf16.xpose.msra.mxu0 0
    %564 = vmatprep.subr.bf16.mxu0 0
    %565 = vmatpush1.bf16.xpose.msra.mxu0 0
    %566 = vmatprep.subr.bf16.mxu0 0
    %567 = vmatpush1.bf16.xpose.msra.mxu0 0
    %568 = vmatprep.subr.bf16.mxu0 0
    %569 = vmatpush1.bf16.xpose.msra.mxu0 0
    %570 = vmatprep.subr.bf16.mxu0 0
    %571 = vmatpush1.bf16.xpose.msra.mxu0 %v556
    %572 = vmatprep.subr.bf16.mxu0 0
    %573 = vmatpush1.bf16.xpose.msra.mxu0 %v553
    %574 = vmatprep.subr.bf16.mxu0 0
    %575 = vmatpush2.bf16.xpose.msra.mxu0 0
    %576 = vmatprep.subr.bf16.mxu0 0
    %577 = vmatpush2.bf16.xpose.msra.mxu0 0
    %578 = vmatprep.subr.bf16.mxu0 0
    %579 = vmatpush2.bf16.xpose.msra.mxu0 0
    %580 = vmatprep.subr.bf16.mxu0 0
    %581 = vmatpush2.bf16.xpose.msra.mxu0 0
    %582 = vmatprep.subr.bf16.mxu0 0
    %583 = vmatpush2.bf16.xpose.msra.mxu0 0
    %584 = vmatprep.subr.bf16.mxu0 0
    %585 = vmatpush2.bf16.xpose.msra.mxu0 0
    %586 = vmatprep.subr.bf16.mxu0 0
    %587 = vmatpush2.bf16.xpose.msra.mxu0 0
    %588 = vmatprep.subr.bf16.mxu0 0
    %589 = vmatpush2.bf16.xpose.msra.mxu0 0
    %590 = vmatprep.mubr.bf16.mxu0 0
    %591 = vmatmul.mubr.bf16.gmra.mxu0 %v550
    %v592 = vpop.f32.mrf.mxu0
    %v593 = vadd.f32 0.0, %v592
    %v594 = vpop.f32.mrf.mxu0
    %v595 = vpop.f32.mrf.mxu0
    %v596 = vpop.f32.mrf.mxu0
    %597 = vdwg.mxu0
    %v602 = vunpack.c.l.b16 %v66
    %v603 = vunpack.c.l.b16 %v67
    %v604 = vunpack.c.l.b16 %v68
    %v605 = vunpack.c.l.b16 %v69
    %v606 = vpack.c.b16 %v603, %v602
    %v607 = vpack.c.b16 %v605, %v604
    %v609 = vsel %vm95, %v300, 0
    %v612 = vsel %vm95, %v606, 0
    %v615 = vsel %vm95, %v607, 0
    %617 = vmatprep.subr.bf16.mxu0 0
    %618 = vmatpush1.bf16.xpose.msra.mxu0 0
    %619 = vmatprep.subr.bf16.mxu0 0
    %620 = vmatpush1.bf16.xpose.msra.mxu0 0
    %621 = vmatprep.subr.bf16.mxu0 0
    %622 = vmatpush1.bf16.xpose.msra.mxu0 0
    %623 = vmatprep.subr.bf16.mxu0 0
    %624 = vmatpush1.bf16.xpose.msra.mxu0 0
    %625 = vmatprep.subr.bf16.mxu0 0
    %626 = vmatpush1.bf16.xpose.msra.mxu0 0
    %627 = vmatprep.subr.bf16.mxu0 0
    %628 = vmatpush1.bf16.xpose.msra.mxu0 0
    %629 = vmatprep.subr.bf16.mxu0 0
    %630 = vmatpush1.bf16.xpose.msra.mxu0 %v615
    %631 = vmatprep.subr.bf16.mxu0 0
    %632 = vmatpush1.bf16.xpose.msra.mxu0 %v612
    %633 = vmatprep.subr.bf16.mxu0 0
    %634 = vmatpush2.bf16.xpose.msra.mxu0 0
    %635 = vmatprep.subr.bf16.mxu0 0
    %636 = vmatpush2.bf16.xpose.msra.mxu0 0
    %637 = vmatprep.subr.bf16.mxu0 0
    %638 = vmatpush2.bf16.xpose.msra.mxu0 0
    %639 = vmatprep.subr.bf16.mxu0 0
    %640 = vmatpush2.bf16.xpose.msra.mxu0 0
    %641 = vmatprep.subr.bf16.mxu0 0
    %642 = vmatpush2.bf16.xpose.msra.mxu0 0
    %643 = vmatprep.subr.bf16.mxu0 0
    %644 = vmatpush2.bf16.xpose.msra.mxu0 0
    %645 = vmatprep.subr.bf16.mxu0 0
    %646 = vmatpush2.bf16.xpose.msra.mxu0 0
    %647 = vmatprep.subr.bf16.mxu0 0
    %648 = vmatpush2.bf16.xpose.msra.mxu0 0
    %649 = vmatprep.mubr.bf16.mxu0 0
    %650 = vmatmul.mubr.bf16.gmra.mxu0 %v609
    %v651 = vpop.f32.mrf.mxu0
    %v652 = vadd.f32 0.0, %v651
    %v653 = vpop.f32.mrf.mxu0
    %v654 = vpop.f32.mrf.mxu0
    %v655 = vpop.f32.mrf.mxu0
    %656 = vdwg.mxu0
    %v661 = vunpack.c.l.b16 %v70
    %v662 = vunpack.c.l.b16 %v71
    %v663 = vunpack.c.l.b16 %v72
    %v664 = vunpack.c.l.b16 %v73
    %v665 = vpack.c.b16 %v662, %v661
    %v666 = vpack.c.b16 %v664, %v663
    %v668 = vsel %vm95, %v301, 0
    %v671 = vsel %vm95, %v665, 0
    %v674 = vsel %vm95, %v666, 0
    %676 = vmatprep.subr.bf16.mxu0 0
    %677 = vmatpush1.bf16.xpose.msra.mxu0 0
    %678 = vmatprep.subr.bf16.mxu0 0
    %679 = vmatpush1.bf16.xpose.msra.mxu0 0
    %680 = vmatprep.subr.bf16.mxu0 0
    %681 = vmatpush1.bf16.xpose.msra.mxu0 0
    %682 = vmatprep.subr.bf16.mxu0 0
    %683 = vmatpush1.bf16.xpose.msra.mxu0 0
    %684 = vmatprep.subr.bf16.mxu0 0
    %685 = vmatpush1.bf16.xpose.msra.mxu0 0
    %686 = vmatprep.subr.bf16.mxu0 0
    %687 = vmatpush1.bf16.xpose.msra.mxu0 0
    %688 = vmatprep.subr.bf16.mxu0 0
    %689 = vmatpush1.bf16.xpose.msra.mxu0 %v674
    %690 = vmatprep.subr.bf16.mxu0 0
    %691 = vmatpush1.bf16.xpose.msra.mxu0 %v671
    %692 = vmatprep.subr.bf16.mxu0 0
    %693 = vmatpush2.bf16.xpose.msra.mxu0 0
    %694 = vmatprep.subr.bf16.mxu0 0
    %695 = vmatpush2.bf16.xpose.msra.mxu0 0
    %696 = vmatprep.subr.bf16.mxu0 0
    %697 = vmatpush2.bf16.xpose.msra.mxu0 0
    %698 = vmatprep.subr.bf16.mxu0 0
    %699 = vmatpush2.bf16.xpose.msra.mxu0 0
    %700 = vmatprep.subr.bf16.mxu0 0
    %701 = vmatpush2.bf16.xpose.msra.mxu0 0
    %702 = vmatprep.subr.bf16.mxu0 0
    %703 = vmatpush2.bf16.xpose.msra.mxu0 0
    %704 = vmatprep.subr.bf16.mxu0 0
    %705 = vmatpush2.bf16.xpose.msra.mxu0 0
    %706 = vmatprep.subr.bf16.mxu0 0
    %707 = vmatpush2.bf16.xpose.msra.mxu0 0
    %708 = vmatprep.mubr.bf16.mxu0 0
    %709 = vmatmul.mubr.bf16.gmra.mxu0 %v668
    %v710 = vpop.f32.mrf.mxu0
    %v711 = vadd.f32 0.0, %v710
    %v712 = vpop.f32.mrf.mxu0
    %v713 = vpop.f32.mrf.mxu0
    %v714 = vpop.f32.mrf.mxu0
    %715 = vdwg.mxu0
    %v720 = vunpack.c.l.b16 %v74
    %v721 = vunpack.c.l.b16 %v75
    %v722 = vunpack.c.l.b16 %v76
    %v723 = vunpack.c.l.b16 %v77
    %v724 = vpack.c.b16 %v721, %v720
    %v725 = vpack.c.b16 %v723, %v722
    %v727 = vsel %vm95, %v302, 0
    %v730 = vsel %vm95, %v724, 0
    %v733 = vsel %vm95, %v725, 0
    %735 = vmatprep.subr.bf16.mxu0 0
    %736 = vmatpush1.bf16.xpose.msra.mxu0 0
    %737 = vmatprep.subr.bf16.mxu0 0
    %738 = vmatpush1.bf16.xpose.msra.mxu0 0
    %739 = vmatprep.subr.bf16.mxu0 0
    %740 = vmatpush1.bf16.xpose.msra.mxu0 0
    %741 = vmatprep.subr.bf16.mxu0 0
    %742 = vmatpush1.bf16.xpose.msra.mxu0 0
    %743 = vmatprep.subr.bf16.mxu0 0
    %744 = vmatpush1.bf16.xpose.msra.mxu0 0
    %745 = vmatprep.subr.bf16.mxu0 0
    %746 = vmatpush1.bf16.xpose.msra.mxu0 0
    %747 = vmatprep.subr.bf16.mxu0 0
    %748 = vmatpush1.bf16.xpose.msra.mxu0 %v733
    %749 = vmatprep.subr.bf16.mxu0 0
    %750 = vmatpush1.bf16.xpose.msra.mxu0 %v730
    %751 = vmatprep.subr.bf16.mxu0 0
    %752 = vmatpush2.bf16.xpose.msra.mxu0 0
    %753 = vmatprep.subr.bf16.mxu0 0
    %754 = vmatpush2.bf16.xpose.msra.mxu0 0
    %755 = vmatprep.subr.bf16.mxu0 0
    %756 = vmatpush2.bf16.xpose.msra.mxu0 0
    %757 = vmatprep.subr.bf16.mxu0 0
    %758 = vmatpush2.bf16.xpose.msra.mxu0 0
    %759 = vmatprep.subr.bf16.mxu0 0
    %760 = vmatpush2.bf16.xpose.msra.mxu0 0
    %761 = vmatprep.subr.bf16.mxu0 0
    %762 = vmatpush2.bf16.xpose.msra.mxu0 0
    %763 = vmatprep.subr.bf16.mxu0 0
    %764 = vmatpush2.bf16.xpose.msra.mxu0 0
    %765 = vmatprep.subr.bf16.mxu0 0
    %766 = vmatpush2.bf16.xpose.msra.mxu0 0
    %767 = vmatprep.mubr.bf16.mxu0 0
    %768 = vmatmul.mubr.bf16.gmra.mxu0 %v727
    %v769 = vpop.f32.mrf.mxu0
    %v770 = vadd.f32 0.0, %v769
    %v771 = vpop.f32.mrf.mxu0
    %v772 = vpop.f32.mrf.mxu0
    %v773 = vpop.f32.mrf.mxu0
    %774 = vdwg.mxu0
    %v775 = vlaneseq
    %v776 = vand.u32 %v775, 127
    %v777 = vlaneseq
    %v778 = vshrl.u32 %v777, 7
    %v779 = vcombine.high %v78, %v78
    %v781 = vunpack.c.l.s4 1966171168
    %v782 = vunpack.c.0.s8 %v781
    %v783 = vlaneseq
    %v784 = vshrl.u32 %v783, 7
    %v785 = vsub.s32 %v782, %v784
    %v786 = vrot.slane %v78, %v785
    %v788 = vunpack.c.l.s4 1966171168
    %v789 = vunpack.c.0.s8 %v788
    %v790 = vlaneseq
    %v791 = vshrl.u32 %v790, 7
    %v792 = vsub.s32 %v789, %v791
    %v793 = vrot.slane %v779, %v792
    %v794 = vcombine.high %v786, %v786
    %v795 = vcombine.high %v793, %v793
    %v797 = vunpack.c.l.s4 1966171168
    %v798 = vunpack.c.0.s8 %v797
    %v799 = vlaneseq
    %v800 = vshrl.u32 %v799, 7
    %v801 = vsub.s32 %v798, %v800
    %v802 = vrot.slane %v786, %v801
    %v804 = vunpack.c.l.s4 1966171168
    %v805 = vunpack.c.0.s8 %v804
    %v806 = vlaneseq
    %v807 = vshrl.u32 %v806, 7
    %v808 = vsub.s32 %v805, %v807
    %v809 = vrot.slane %v793, %v808
    %v811 = vunpack.c.l.s4 1966171168
    %v812 = vunpack.c.0.s8 %v811
    %v813 = vlaneseq
    %v814 = vshrl.u32 %v813, 7
    %v815 = vsub.s32 %v812, %v814
    %v816 = vrot.slane %v794, %v815
    %v818 = vunpack.c.l.s4 1966171168
    %v819 = vunpack.c.0.s8 %v818
    %v820 = vlaneseq
    %v821 = vshrl.u32 %v820, 7
    %v822 = vsub.s32 %v819, %v821
    %v823 = vrot.slane %v795, %v822
    %v824 = vcombine.high %v802, %v802
    %v825 = vcombine.high %v809, %v809
    %v826 = vcombine.high %v816, %v816
    %v827 = vcombine.high %v823, %v823
    %vm828 = vcmp.eq.s32.totalorder %v778, 0
    %vm829 = vcmp.lt.s32.totalorder %v776, 16
    %vm830 = vmand %vm828, %vm829
    %vm831 = vcmp.eq.s32.totalorder %v778, 1
    %vm832 = vcmp.ge.s32.totalorder %v776, 16
    %vm833 = vmand %vm831, %vm832
    %v834 = vadd.s32 %v802, 16
    %v835 = vadd.s32 %v816, 16
    %v836 = vadd.s32 %v824, 16
    %v837 = vadd.s32 %v826, 16
    %v838 = vadd.s32 %v809, 16
    %v839 = vadd.s32 %v823, 16
    %v840 = vadd.s32 %v825, 16
    %v841 = vadd.s32 %v827, 16
    %v842 = vlaneseq
    %v843 = vshrl.u32 %v842, 7
    %v844 = vsub.s32 0, %v843
    %v845 = vrot.slane %v834, %v844
    %v846 = vlaneseq
    %v847 = vshrl.u32 %v846, 7
    %v848 = vsub.s32 0, %v847
    %v849 = vrot.slane %v835, %v848
    %v850 = vlaneseq
    %v851 = vshrl.u32 %v850, 7
    %v852 = vsub.s32 0, %v851
    %v853 = vrot.slane %v836, %v852
    %v854 = vlaneseq
    %v855 = vshrl.u32 %v854, 7
    %v856 = vsub.s32 0, %v855
    %v857 = vrot.slane %v837, %v856
    %v858 = vlaneseq
    %v859 = vshrl.u32 %v858, 7
    %v860 = vsub.s32 0, %v859
    %v861 = vrot.slane %v838, %v860
    %v862 = vlaneseq
    %v863 = vshrl.u32 %v862, 7
    %v864 = vsub.s32 0, %v863
    %v865 = vrot.slane %v839, %v864
    %v866 = vlaneseq
    %v867 = vshrl.u32 %v866, 7
    %v868 = vsub.s32 0, %v867
    %v869 = vrot.slane %v840, %v868
    %v870 = vlaneseq
    %v871 = vshrl.u32 %v870, 7
    %v872 = vsub.s32 0, %v871
    %v873 = vrot.slane %v841, %v872
    %874 = vset.pattern.permute.xlu0 0
    %875 = vperm.xlu0 %874, %v845
    %v876 = vpop.permute.xlu0 %875
    %877 = vset.pattern.permute.xlu0 0
    %878 = vperm.xlu0 %877, %v849
    %v879 = vpop.permute.xlu0 %878
    %880 = vset.pattern.permute.xlu0 0
    %881 = vperm.xlu0 %880, %v853
    %v882 = vpop.permute.xlu0 %881
    %883 = vset.pattern.permute.xlu0 0
    %884 = vperm.xlu0 %883, %v857
    %v885 = vpop.permute.xlu0 %884
    %886 = vset.pattern.permute.xlu0 0
    %887 = vperm.xlu0 %886, %v861
    %v888 = vpop.permute.xlu0 %887
    %889 = vset.pattern.permute.xlu0 0
    %890 = vperm.xlu0 %889, %v865
    %v891 = vpop.permute.xlu0 %890
    %892 = vset.pattern.permute.xlu0 0
    %893 = vperm.xlu0 %892, %v869
    %v894 = vpop.permute.xlu0 %893
    %895 = vset.pattern.permute.xlu0 0
    %896 = vperm.xlu0 %895, %v873
    %v897 = vpop.permute.xlu0 %896
    %vm898 = vcmp.lt.s32.totalorder %v776, %v876
    %vm899 = vcmp.lt.s32.totalorder %v776, %v879
    %vm900 = vcmp.lt.s32.totalorder %v776, %v882
    %vm901 = vcmp.lt.s32.totalorder %v776, %v885
    %vm902 = vcmp.lt.s32.totalorder %v776, %v888
    %vm903 = vcmp.lt.s32.totalorder %v776, %v891
    %vm904 = vcmp.lt.s32.totalorder %v776, %v894
    %vm905 = vcmp.lt.s32.totalorder %v776, %v897
    %vm906 = vmand %vm833, %vm898
    %vm907 = vmand %vm833, %vm899
    %vm908 = vmand %vm833, %vm900
    %vm909 = vmand %vm833, %vm901
    %vm910 = vmand %vm833, %vm902
    %vm911 = vmand %vm833, %vm903
    %vm912 = vmand %vm833, %vm904
    %vm913 = vmand %vm833, %vm905
    %vm914 = vcmp.eq.s32.totalorder %v778, 2
    %vm915 = vcmp.ge.s32.totalorder %v776, 24
    %vm916 = vmand %vm914, %vm915
    %v917 = vadd.s32 %v802, 24
    %v918 = vadd.s32 %v816, 24
    %v919 = vadd.s32 %v824, 24
    %v920 = vadd.s32 %v826, 24
    %v921 = vadd.s32 %v809, 24
    %v922 = vadd.s32 %v823, 24
    %v923 = vadd.s32 %v825, 24
    %v924 = vadd.s32 %v827, 24
    %v925 = vlaneseq
    %v926 = vshrl.u32 %v925, 7
    %v927 = vsub.s32 0, %v926
    %v928 = vrot.slane %v917, %v927
    %v929 = vlaneseq
    %v930 = vshrl.u32 %v929, 7
    %v931 = vsub.s32 0, %v930
    %v932 = vrot.slane %v918, %v931
    %v933 = vlaneseq
    %v934 = vshrl.u32 %v933, 7
    %v935 = vsub.s32 0, %v934
    %v936 = vrot.slane %v919, %v935
    %v937 = vlaneseq
    %v938 = vshrl.u32 %v937, 7
    %v939 = vsub.s32 0, %v938
    %v940 = vrot.slane %v920, %v939
    %v941 = vlaneseq
    %v942 = vshrl.u32 %v941, 7
    %v943 = vsub.s32 0, %v942
    %v944 = vrot.slane %v921, %v943
    %v945 = vlaneseq
    %v946 = vshrl.u32 %v945, 7
    %v947 = vsub.s32 0, %v946
    %v948 = vrot.slane %v922, %v947
    %v949 = vlaneseq
    %v950 = vshrl.u32 %v949, 7
    %v951 = vsub.s32 0, %v950
    %v952 = vrot.slane %v923, %v951
    %v953 = vlaneseq
    %v954 = vshrl.u32 %v953, 7
    %v955 = vsub.s32 0, %v954
    %v956 = vrot.slane %v924, %v955
    %957 = vset.pattern.permute.xlu0 1
    %958 = vperm.xlu0 %957, %v928
    %v959 = vpop.permute.xlu0 %958
    %960 = vset.pattern.permute.xlu0 1
    %961 = vperm.xlu0 %960, %v932
    %v962 = vpop.permute.xlu0 %961
    %963 = vset.pattern.permute.xlu0 1
    %964 = vperm.xlu0 %963, %v936
    %v965 = vpop.permute.xlu0 %964
    %966 = vset.pattern.permute.xlu0 1
    %967 = vperm.xlu0 %966, %v940
    %v968 = vpop.permute.xlu0 %967
    %969 = vset.pattern.permute.xlu0 1
    %970 = vperm.xlu0 %969, %v944
    %v971 = vpop.permute.xlu0 %970
    %972 = vset.pattern.permute.xlu0 1
    %973 = vperm.xlu0 %972, %v948
    %v974 = vpop.permute.xlu0 %973
    %975 = vset.pattern.permute.xlu0 1
    %976 = vperm.xlu0 %975, %v952
    %v977 = vpop.permute.xlu0 %976
    %978 = vset.pattern.permute.xlu0 1
    %979 = vperm.xlu0 %978, %v956
    %v980 = vpop.permute.xlu0 %979
    %vm981 = vcmp.lt.s32.totalorder %v776, %v959
    %vm982 = vcmp.lt.s32.totalorder %v776, %v962
    %vm983 = vcmp.lt.s32.totalorder %v776, %v965
    %vm984 = vcmp.lt.s32.totalorder %v776, %v968
    %vm985 = vcmp.lt.s32.totalorder %v776, %v971
    %vm986 = vcmp.lt.s32.totalorder %v776, %v974
    %vm987 = vcmp.lt.s32.totalorder %v776, %v977
    %vm988 = vcmp.lt.s32.totalorder %v776, %v980
    %vm989 = vmand %vm916, %vm981
    %vm990 = vmand %vm916, %vm982
    %vm991 = vmand %vm916, %vm983
    %vm992 = vmand %vm916, %vm984
    %vm993 = vmand %vm916, %vm985
    %vm994 = vmand %vm916, %vm986
    %vm995 = vmand %vm916, %vm987
    %vm996 = vmand %vm916, %vm988
    %vm997 = vmor %vm830, %vm906
    %vm998 = vmor %vm830, %vm907
    %vm999 = vmor %vm830, %vm908
    %vm1000 = vmor %vm830, %vm909
    %vm1001 = vmor %vm830, %vm910
    %vm1002 = vmor %vm830, %vm911
    %vm1003 = vmor %vm830, %vm912
    %vm1004 = vmor %vm830, %vm913
    %vm1005 = vmor %vm997, %vm989
    %vm1006 = vmor %vm998, %vm990
    %vm1007 = vmor %vm999, %vm991
    %vm1008 = vmor %vm1000, %vm992
    %vm1009 = vmor %vm1001, %vm993
    %vm1010 = vmor %vm1002, %vm994
    %vm1011 = vmor %vm1003, %vm995
    %vm1012 = vmor %vm1004, %vm996
    %v1013 = vsel %vm1005, %v357, -1e+09
    %v1014 = vsel %vm1006, %v416, -1e+09
    %v1015 = vsel %vm1007, %v475, -1e+09
    %v1016 = vsel %vm1008, %v534, -1e+09
    %v1017 = vsel %vm1009, %v593, -1e+09
    %v1018 = vsel %vm1010, %v652, -1e+09
    %v1019 = vsel %vm1011, %v711, -1e+09
    %v1020 = vsel %vm1012, %v770, -1e+09
    %vm1021 = vcmask 256000
    %v1022 = vsel %vm1021, %v1013, -inf
    %1023 = vmax.xlane.f32.xlu0 %v1022
    %v1024 = vpop.xlane.xlu0 %1023
    %v1025 = vsel %vm1021, %v1014, -inf
    %1026 = vmax.xlane.f32.xlu0 %v1025
    %v1027 = vpop.xlane.xlu0 %1026
    %v1028 = vsel %vm1021, %v1015, -inf
    %1029 = vmax.xlane.f32.xlu0 %v1028
    %v1030 = vpop.xlane.xlu0 %1029
    %v1031 = vsel %vm1021, %v1016, -inf
    %1032 = vmax.xlane.f32.xlu0 %v1031
    %v1033 = vpop.xlane.xlu0 %1032
    %v1034 = vsel %vm1021, %v1017, -inf
    %1035 = vmax.xlane.f32.xlu0 %v1034
    %v1036 = vpop.xlane.xlu0 %1035
    %v1037 = vsel %vm1021, %v1018, -inf
    %1038 = vmax.xlane.f32.xlu0 %v1037
    %v1039 = vpop.xlane.xlu0 %1038
    %v1040 = vsel %vm1021, %v1019, -inf
    %1041 = vmax.xlane.f32.xlu0 %v1040
    %v1042 = vpop.xlane.xlu0 %1041
    %v1043 = vsel %vm1021, %v1020, -inf
    %1044 = vmax.xlane.f32.xlu0 %v1043
    %v1045 = vpop.xlane.xlu0 %1044
    %v1046 = vsub.f32 %v1013, %v1024
    %v1047 = vsub.f32 %v1014, %v1027
    %v1048 = vsub.f32 %v1015, %v1030
    %v1049 = vsub.f32 %v1016, %v1033
    %v1050 = vsub.f32 %v1017, %v1036
    %v1051 = vsub.f32 %v1018, %v1039
    %v1052 = vsub.f32 %v1019, %v1042
    %v1053 = vsub.f32 %v1020, %v1045
    %v1054 = vmul.f32 %v1046, 1.442695
    %v1055 = vpow.pop %v1054
    %v1056 = vmul.f32 %v1047, 1.442695
    %v1057 = vpow.pop %v1056
    %v1058 = vmul.f32 %v1048, 1.442695
    %v1059 = vpow.pop %v1058
    %v1060 = vmul.f32 %v1049, 1.442695
    %v1061 = vpow.pop %v1060
    %v1062 = vmul.f32 %v1050, 1.442695
    %v1063 = vpow.pop %v1062
    %v1064 = vmul.f32 %v1051, 1.442695
    %v1065 = vpow.pop %v1064
    %v1066 = vmul.f32 %v1052, 1.442695
    %v1067 = vpow.pop %v1066
    %v1068 = vmul.f32 %v1053, 1.442695
    %v1069 = vpow.pop %v1068
    %v1070 = vsel %vm1021, %v1055, 0.0
    %1071 = vadd.xlane.f32.xlu0 %v1070
    %v1072 = vpop.xlane.xlu0 %1071
    %v1073 = vsel %vm1021, %v1057, 0.0
    %1074 = vadd.xlane.f32.xlu0 %v1073
    %v1075 = vpop.xlane.xlu0 %1074
    %v1076 = vsel %vm1021, %v1059, 0.0
    %1077 = vadd.xlane.f32.xlu0 %v1076
    %v1078 = vpop.xlane.xlu0 %1077
    %v1079 = vsel %vm1021, %v1061, 0.0
    %1080 = vadd.xlane.f32.xlu0 %v1079
    %v1081 = vpop.xlane.xlu0 %1080
    %v1082 = vsel %vm1021, %v1063, 0.0
    %1083 = vadd.xlane.f32.xlu0 %v1082
    %v1084 = vpop.xlane.xlu0 %1083
    %v1085 = vsel %vm1021, %v1065, 0.0
    %1086 = vadd.xlane.f32.xlu0 %v1085
    %v1087 = vpop.xlane.xlu0 %1086
    %v1088 = vsel %vm1021, %v1067, 0.0
    %1089 = vadd.xlane.f32.xlu0 %v1088
    %v1090 = vpop.xlane.xlu0 %1089
    %v1091 = vsel %vm1021, %v1069, 0.0
    %1092 = vadd.xlane.f32.xlu0 %v1091
    %v1093 = vpop.xlane.xlu0 %1092
    %v1094 = vrcp.pop %v1072
    %v1095 = vrcp.pop %v1075
    %v1096 = vrcp.pop %v1078
    %v1097 = vrcp.pop %v1081
    %v1098 = vrcp.pop %v1084
    %v1099 = vrcp.pop %v1087
    %v1100 = vrcp.pop %v1090
    %v1101 = vrcp.pop %v1093
    %v1102 = vmul.f32 %v1055, %v1094
    %v1103 = vmul.f32 %v1057, %v1095
    %v1104 = vmul.f32 %v1059, %v1096
    %v1105 = vmul.f32 %v1061, %v1097
    %v1106 = vmul.f32 %v1063, %v1098
    %v1107 = vmul.f32 %v1065, %v1099
    %v1108 = vmul.f32 %v1067, %v1100
    %v1109 = vmul.f32 %v1069, %v1101
    %v1110 = vsel %vm1005, %v1102, 0.0
    %v1111 = vsel %vm1006, %v1103, 0.0
    %v1112 = vsel %vm1007, %v1104, 0.0
    %v1113 = vsel %vm1008, %v1105, 0.0
    %v1114 = vsel %vm1009, %v1106, 0.0
    %v1115 = vsel %vm1010, %v1107, 0.0
    %v1116 = vsel %vm1011, %v1108, 0.0
    %v1117 = vsel %vm1012, %v1109, 0.0
    %v1118 = vpack.c.bf16 %v1110, %v1110
    %v1119 = vpack.c.bf16 %v1111, %v1111
    %v1120 = vpack.c.bf16 %v1112, %v1112
    %v1121 = vpack.c.bf16 %v1113, %v1113
    %v1122 = vpack.c.bf16 %v1114, %v1114
    %v1123 = vpack.c.bf16 %v1115, %v1115
    %v1124 = vpack.c.bf16 %v1116, %v1116
    %v1125 = vpack.c.bf16 %v1117, %v1117
    %v1129 = vsel %vm95, %v1118, 0
    %1131 = vmatprep.subr.bf16.mxu0 0
    %1132 = vmatpush1.bf16.msra.mxu0 0
    %1133 = vmatprep.subr.bf16.mxu0 0
    %1134 = vmatpush1.bf16.msra.mxu0 0
    %1135 = vmatprep.subr.bf16.mxu0 0
    %1136 = vmatpush1.bf16.msra.mxu0 0
    %1137 = vmatprep.subr.bf16.mxu0 0
    %1138 = vmatpush1.bf16.msra.mxu0 0
    %1139 = vmatprep.subr.bf16.mxu0 0
    %1140 = vmatpush1.bf16.msra.mxu0 0
    %1141 = vmatprep.subr.bf16.mxu0 0
    %1142 = vmatpush1.bf16.msra.mxu0 0
    %1143 = vmatprep.subr.bf16.mxu0 0
    %1144 = vmatpush1.bf16.msra.mxu0 %v312
    %1145 = vmatprep.subr.bf16.mxu0 0
    %1146 = vmatpush1.bf16.msra.mxu0 %v311
    %1147 = vmatprep.subr.bf16.mxu0 0
    %1148 = vmatpush2.bf16.msra.mxu0 0
    %1149 = vmatprep.subr.bf16.mxu0 0
    %1150 = vmatpush2.bf16.msra.mxu0 0
    %1151 = vmatprep.subr.bf16.mxu0 0
    %1152 = vmatpush2.bf16.msra.mxu0 0
    %1153 = vmatprep.subr.bf16.mxu0 0
    %1154 = vmatpush2.bf16.msra.mxu0 0
    %1155 = vmatprep.subr.bf16.mxu0 0
    %1156 = vmatpush2.bf16.msra.mxu0 0
    %1157 = vmatprep.subr.bf16.mxu0 0
    %1158 = vmatpush2.bf16.msra.mxu0 0
    %1159 = vmatprep.subr.bf16.mxu0 0
    %1160 = vmatpush2.bf16.msra.mxu0 0
    %1161 = vmatprep.subr.bf16.mxu0 0
    %1162 = vmatpush2.bf16.msra.mxu0 0
    %1163 = vmatprep.mubr.bf16.mxu0 0
    %1164 = vmatmul.mubr.bf16.gmra.mxu0 %v1129
    %v1165 = vpop.f32.mrf.mxu0
    %v1166 = vadd.f32 0.0, %v1165
    %v1167 = vpop.f32.mrf.mxu0
    %v1168 = vpop.f32.mrf.mxu0
    %v1169 = vpop.f32.mrf.mxu0
    %1170 = vdwg.mxu0
    %v1174 = vsel %vm95, %v1119, 0
    %1176 = vmatprep.subr.bf16.mxu0 0
    %1177 = vmatpush1.bf16.msra.mxu0 0
    %1178 = vmatprep.subr.bf16.mxu0 0
    %1179 = vmatpush1.bf16.msra.mxu0 0
    %1180 = vmatprep.subr.bf16.mxu0 0
    %1181 = vmatpush1.bf16.msra.mxu0 0
    %1182 = vmatprep.subr.bf16.mxu0 0
    %1183 = vmatpush1.bf16.msra.mxu0 0
    %1184 = vmatprep.subr.bf16.mxu0 0
    %1185 = vmatpush1.bf16.msra.mxu0 0
    %1186 = vmatprep.subr.bf16.mxu0 0
    %1187 = vmatpush1.bf16.msra.mxu0 0
    %1188 = vmatprep.subr.bf16.mxu0 0
    %1189 = vmatpush1.bf16.msra.mxu0 %v371
    %1190 = vmatprep.subr.bf16.mxu0 0
    %1191 = vmatpush1.bf16.msra.mxu0 %v370
    %1192 = vmatprep.subr.bf16.mxu0 0
    %1193 = vmatpush2.bf16.msra.mxu0 0
    %1194 = vmatprep.subr.bf16.mxu0 0
    %1195 = vmatpush2.bf16.msra.mxu0 0
    %1196 = vmatprep.subr.bf16.mxu0 0
    %1197 = vmatpush2.bf16.msra.mxu0 0
    %1198 = vmatprep.subr.bf16.mxu0 0
    %1199 = vmatpush2.bf16.msra.mxu0 0
    %1200 = vmatprep.subr.bf16.mxu0 0
    %1201 = vmatpush2.bf16.msra.mxu0 0
    %1202 = vmatprep.subr.bf16.mxu0 0
    %1203 = vmatpush2.bf16.msra.mxu0 0
    %1204 = vmatprep.subr.bf16.mxu0 0
    %1205 = vmatpush2.bf16.msra.mxu0 0
    %1206 = vmatprep.subr.bf16.mxu0 0
    %1207 = vmatpush2.bf16.msra.mxu0 0
    %1208 = vmatprep.mubr.bf16.mxu0 0
    %1209 = vmatmul.mubr.bf16.gmra.mxu0 %v1174
    %v1210 = vpop.f32.mrf.mxu0
    %v1211 = vadd.f32 0.0, %v1210
    %v1212 = vpop.f32.mrf.mxu0
    %v1213 = vpop.f32.mrf.mxu0
    %v1214 = vpop.f32.mrf.mxu0
    %1215 = vdwg.mxu0
    %v1219 = vsel %vm95, %v1120, 0
    %1221 = vmatprep.subr.bf16.mxu0 0
    %1222 = vmatpush1.bf16.msra.mxu0 0
    %1223 = vmatprep.subr.bf16.mxu0 0
    %1224 = vmatpush1.bf16.msra.mxu0 0
    %1225 = vmatprep.subr.bf16.mxu0 0
    %1226 = vmatpush1.bf16.msra.mxu0 0
    %1227 = vmatprep.subr.bf16.mxu0 0
    %1228 = vmatpush1.bf16.msra.mxu0 0
    %1229 = vmatprep.subr.bf16.mxu0 0
    %1230 = vmatpush1.bf16.msra.mxu0 0
    %1231 = vmatprep.subr.bf16.mxu0 0
    %1232 = vmatpush1.bf16.msra.mxu0 0
    %1233 = vmatprep.subr.bf16.mxu0 0
    %1234 = vmatpush1.bf16.msra.mxu0 %v430
    %1235 = vmatprep.subr.bf16.mxu0 0
    %1236 = vmatpush1.bf16.msra.mxu0 %v429
    %1237 = vmatprep.subr.bf16.mxu0 0
    %1238 = vmatpush2.bf16.msra.mxu0 0
    %1239 = vmatprep.subr.bf16.mxu0 0
    %1240 = vmatpush2.bf16.msra.mxu0 0
    %1241 = vmatprep.subr.bf16.mxu0 0
    %1242 = vmatpush2.bf16.msra.mxu0 0
    %1243 = vmatprep.subr.bf16.mxu0 0
    %1244 = vmatpush2.bf16.msra.mxu0 0
    %1245 = vmatprep.subr.bf16.mxu0 0
    %1246 = vmatpush2.bf16.msra.mxu0 0
    %1247 = vmatprep.subr.bf16.mxu0 0
    %1248 = vmatpush2.bf16.msra.mxu0 0
    %1249 = vmatprep.subr.bf16.mxu0 0
    %1250 = vmatpush2.bf16.msra.mxu0 0
    %1251 = vmatprep.subr.bf16.mxu0 0
    %1252 = vmatpush2.bf16.msra.mxu0 0
    %1253 = vmatprep.mubr.bf16.mxu0 0
    %1254 = vmatmul.mubr.bf16.gmra.mxu0 %v1219
    %v1255 = vpop.f32.mrf.mxu0
    %v1256 = vadd.f32 0.0, %v1255
    %v1257 = vpop.f32.mrf.mxu0
    %v1258 = vpop.f32.mrf.mxu0
    %v1259 = vpop.f32.mrf.mxu0
    %1260 = vdwg.mxu0
    %v1264 = vsel %vm95, %v1121, 0
    %1266 = vmatprep.subr.bf16.mxu0 0
    %1267 = vmatpush1.bf16.msra.mxu0 0
    %1268 = vmatprep.subr.bf16.mxu0 0
    %1269 = vmatpush1.bf16.msra.mxu0 0
    %1270 = vmatprep.subr.bf16.mxu0 0
    %1271 = vmatpush1.bf16.msra.mxu0 0
    %1272 = vmatprep.subr.bf16.mxu0 0
    %1273 = vmatpush1.bf16.msra.mxu0 0
    %1274 = vmatprep.subr.bf16.mxu0 0
    %1275 = vmatpush1.bf16.msra.mxu0 0
    %1276 = vmatprep.subr.bf16.mxu0 0
    %1277 = vmatpush1.bf16.msra.mxu0 0
    %1278 = vmatprep.subr.bf16.mxu0 0
    %1279 = vmatpush1.bf16.msra.mxu0 %v489
    %1280 = vmatprep.subr.bf16.mxu0 0
    %1281 = vmatpush1.bf16.msra.mxu0 %v488
    %1282 = vmatprep.subr.bf16.mxu0 0
    %1283 = vmatpush2.bf16.msra.mxu0 0
    %1284 = vmatprep.subr.bf16.mxu0 0
    %1285 = vmatpush2.bf16.msra.mxu0 0
    %1286 = vmatprep.subr.bf16.mxu0 0
    %1287 = vmatpush2.bf16.msra.mxu0 0
    %1288 = vmatprep.subr.bf16.mxu0 0
    %1289 = vmatpush2.bf16.msra.mxu0 0
    %1290 = vmatprep.subr.bf16.mxu0 0
    %1291 = vmatpush2.bf16.msra.mxu0 0
    %1292 = vmatprep.subr.bf16.mxu0 0
    %1293 = vmatpush2.bf16.msra.mxu0 0
    %1294 = vmatprep.subr.bf16.mxu0 0
    %1295 = vmatpush2.bf16.msra.mxu0 0
    %1296 = vmatprep.subr.bf16.mxu0 0
    %1297 = vmatpush2.bf16.msra.mxu0 0
    %1298 = vmatprep.mubr.bf16.mxu0 0
    %1299 = vmatmul.mubr.bf16.gmra.mxu0 %v1264
    %v1300 = vpop.f32.mrf.mxu0
    %v1301 = vadd.f32 0.0, %v1300
    %v1302 = vpop.f32.mrf.mxu0
    %v1303 = vpop.f32.mrf.mxu0
    %v1304 = vpop.f32.mrf.mxu0
    %1305 = vdwg.mxu0
    %v1309 = vsel %vm95, %v1122, 0
    %1311 = vmatprep.subr.bf16.mxu0 0
    %1312 = vmatpush1.bf16.msra.mxu0 0
    %1313 = vmatprep.subr.bf16.mxu0 0
    %1314 = vmatpush1.bf16.msra.mxu0 0
    %1315 = vmatprep.subr.bf16.mxu0 0
    %1316 = vmatpush1.bf16.msra.mxu0 0
    %1317 = vmatprep.subr.bf16.mxu0 0
    %1318 = vmatpush1.bf16.msra.mxu0 0
    %1319 = vmatprep.subr.bf16.mxu0 0
    %1320 = vmatpush1.bf16.msra.mxu0 0
    %1321 = vmatprep.subr.bf16.mxu0 0
    %1322 = vmatpush1.bf16.msra.mxu0 0
    %1323 = vmatprep.subr.bf16.mxu0 0
    %1324 = vmatpush1.bf16.msra.mxu0 %v548
    %1325 = vmatprep.subr.bf16.mxu0 0
    %1326 = vmatpush1.bf16.msra.mxu0 %v547
    %1327 = vmatprep.subr.bf16.mxu0 0
    %1328 = vmatpush2.bf16.msra.mxu0 0
    %1329 = vmatprep.subr.bf16.mxu0 0
    %1330 = vmatpush2.bf16.msra.mxu0 0
    %1331 = vmatprep.subr.bf16.mxu0 0
    %1332 = vmatpush2.bf16.msra.mxu0 0
    %1333 = vmatprep.subr.bf16.mxu0 0
    %1334 = vmatpush2.bf16.msra.mxu0 0
    %1335 = vmatprep.subr.bf16.mxu0 0
    %1336 = vmatpush2.bf16.msra.mxu0 0
    %1337 = vmatprep.subr.bf16.mxu0 0
    %1338 = vmatpush2.bf16.msra.mxu0 0
    %1339 = vmatprep.subr.bf16.mxu0 0
    %1340 = vmatpush2.bf16.msra.mxu0 0
    %1341 = vmatprep.subr.bf16.mxu0 0
    %1342 = vmatpush2.bf16.msra.mxu0 0
    %1343 = vmatprep.mubr.bf16.mxu0 0
    %1344 = vmatmul.mubr.bf16.gmra.mxu0 %v1309
    %v1345 = vpop.f32.mrf.mxu0
    %v1346 = vadd.f32 0.0, %v1345
    %v1347 = vpop.f32.mrf.mxu0
    %v1348 = vpop.f32.mrf.mxu0
    %v1349 = vpop.f32.mrf.mxu0
    %1350 = vdwg.mxu0
    %v1354 = vsel %vm95, %v1123, 0
    %1356 = vmatprep.subr.bf16.mxu0 0
    %1357 = vmatpush1.bf16.msra.mxu0 0
    %1358 = vmatprep.subr.bf16.mxu0 0
    %1359 = vmatpush1.bf16.msra.mxu0 0
    %1360 = vmatprep.subr.bf16.mxu0 0
    %1361 = vmatpush1.bf16.msra.mxu0 0
    %1362 = vmatprep.subr.bf16.mxu0 0
    %1363 = vmatpush1.bf16.msra.mxu0 0
    %1364 = vmatprep.subr.bf16.mxu0 0
    %1365 = vmatpush1.bf16.msra.mxu0 0
    %1366 = vmatprep.subr.bf16.mxu0 0
    %1367 = vmatpush1.bf16.msra.mxu0 0
    %1368 = vmatprep.subr.bf16.mxu0 0
    %1369 = vmatpush1.bf16.msra.mxu0 %v607
    %1370 = vmatprep.subr.bf16.mxu0 0
    %1371 = vmatpush1.bf16.msra.mxu0 %v606
    %1372 = vmatprep.subr.bf16.mxu0 0
    %1373 = vmatpush2.bf16.msra.mxu0 0
    %1374 = vmatprep.subr.bf16.mxu0 0
    %1375 = vmatpush2.bf16.msra.mxu0 0
    %1376 = vmatprep.subr.bf16.mxu0 0
    %1377 = vmatpush2.bf16.msra.mxu0 0
    %1378 = vmatprep.subr.bf16.mxu0 0
    %1379 = vmatpush2.bf16.msra.mxu0 0
    %1380 = vmatprep.subr.bf16.mxu0 0
    %1381 = vmatpush2.bf16.msra.mxu0 0
    %1382 = vmatprep.subr.bf16.mxu0 0
    %1383 = vmatpush2.bf16.msra.mxu0 0
    %1384 = vmatprep.subr.bf16.mxu0 0
    %1385 = vmatpush2.bf16.msra.mxu0 0
    %1386 = vmatprep.subr.bf16.mxu0 0
    %1387 = vmatpush2.bf16.msra.mxu0 0
    %1388 = vmatprep.mubr.bf16.mxu0 0
    %1389 = vmatmul.mubr.bf16.gmra.mxu0 %v1354
    %v1390 = vpop.f32.mrf.mxu0
    %v1391 = vadd.f32 0.0, %v1390
    %v1392 = vpop.f32.mrf.mxu0
    %v1393 = vpop.f32.mrf.mxu0
    %v1394 = vpop.f32.mrf.mxu0
    %1395 = vdwg.mxu0
    %v1399 = vsel %vm95, %v1124, 0
    %1401 = vmatprep.subr.bf16.mxu0 0
    %1402 = vmatpush1.bf16.msra.mxu0 0
    %1403 = vmatprep.subr.bf16.mxu0 0
    %1404 = vmatpush1.bf16.msra.mxu0 0
    %1405 = vmatprep.subr.bf16.mxu0 0
    %1406 = vmatpush1.bf16.msra.mxu0 0
    %1407 = vmatprep.subr.bf16.mxu0 0
    %1408 = vmatpush1.bf16.msra.mxu0 0
    %1409 = vmatprep.subr.bf16.mxu0 0
    %1410 = vmatpush1.bf16.msra.mxu0 0
    %1411 = vmatprep.subr.bf16.mxu0 0
    %1412 = vmatpush1.bf16.msra.mxu0 0
    %1413 = vmatprep.subr.bf16.mxu0 0
    %1414 = vmatpush1.bf16.msra.mxu0 %v666
    %1415 = vmatprep.subr.bf16.mxu0 0
    %1416 = vmatpush1.bf16.msra.mxu0 %v665
    %1417 = vmatprep.subr.bf16.mxu0 0
    %1418 = vmatpush2.bf16.msra.mxu0 0
    %1419 = vmatprep.subr.bf16.mxu0 0
    %1420 = vmatpush2.bf16.msra.mxu0 0
    %1421 = vmatprep.subr.bf16.mxu0 0
    %1422 = vmatpush2.bf16.msra.mxu0 0
    %1423 = vmatprep.subr.bf16.mxu0 0
    %1424 = vmatpush2.bf16.msra.mxu0 0
    %1425 = vmatprep.subr.bf16.mxu0 0
    %1426 = vmatpush2.bf16.msra.mxu0 0
    %1427 = vmatprep.subr.bf16.mxu0 0
    %1428 = vmatpush2.bf16.msra.mxu0 0
    %1429 = vmatprep.subr.bf16.mxu0 0
    %1430 = vmatpush2.bf16.msra.mxu0 0
    %1431 = vmatprep.subr.bf16.mxu0 0
    %1432 = vmatpush2.bf16.msra.mxu0 0
    %1433 = vmatprep.mubr.bf16.mxu0 0
    %1434 = vmatmul.mubr.bf16.gmra.mxu0 %v1399
    %v1435 = vpop.f32.mrf.mxu0
    %v1436 = vadd.f32 0.0, %v1435
    %v1437 = vpop.f32.mrf.mxu0
    %v1438 = vpop.f32.mrf.mxu0
    %v1439 = vpop.f32.mrf.mxu0
    %1440 = vdwg.mxu0
    %v1444 = vsel %vm95, %v1125, 0
    %1446 = vmatprep.subr.bf16.mxu0 0
    %1447 = vmatpush1.bf16.msra.mxu0 0
    %1448 = vmatprep.subr.bf16.mxu0 0
    %1449 = vmatpush1.bf16.msra.mxu0 0
    %1450 = vmatprep.subr.bf16.mxu0 0
    %1451 = vmatpush1.bf16.msra.mxu0 0
    %1452 = vmatprep.subr.bf16.mxu0 0
    %1453 = vmatpush1.bf16.msra.mxu0 0
    %1454 = vmatprep.subr.bf16.mxu0 0
    %1455 = vmatpush1.bf16.msra.mxu0 0
    %1456 = vmatprep.subr.bf16.mxu0 0
    %1457 = vmatpush1.bf16.msra.mxu0 0
    %1458 = vmatprep.subr.bf16.mxu0 0
    %1459 = vmatpush1.bf16.msra.mxu0 %v725
    %1460 = vmatprep.subr.bf16.mxu0 0
    %1461 = vmatpush1.bf16.msra.mxu0 %v724
    %1462 = vmatprep.subr.bf16.mxu0 0
    %1463 = vmatpush2.bf16.msra.mxu0 0
    %1464 = vmatprep.subr.bf16.mxu0 0
    %1465 = vmatpush2.bf16.msra.mxu0 0
    %1466 = vmatprep.subr.bf16.mxu0 0
    %1467 = vmatpush2.bf16.msra.mxu0 0
    %1468 = vmatprep.subr.bf16.mxu0 0
    %1469 = vmatpush2.bf16.msra.mxu0 0
    %1470 = vmatprep.subr.bf16.mxu0 0
    %1471 = vmatpush2.bf16.msra.mxu0 0
    %1472 = vmatprep.subr.bf16.mxu0 0
    %1473 = vmatpush2.bf16.msra.mxu0 0
    %1474 = vmatprep.subr.bf16.mxu0 0
    %1475 = vmatpush2.bf16.msra.mxu0 0
    %1476 = vmatprep.subr.bf16.mxu0 0
    %1477 = vmatpush2.bf16.msra.mxu0 0
    %1478 = vmatprep.mubr.bf16.mxu0 0
    %1479 = vmatmul.mubr.bf16.gmra.mxu0 %v1444
    %v1480 = vpop.f32.mrf.mxu0
    %v1481 = vadd.f32 0.0, %v1480
    %v1482 = vpop.f32.mrf.mxu0
    %v1483 = vpop.f32.mrf.mxu0
    %v1484 = vpop.f32.mrf.mxu0
    %1485 = vdwg.mxu0
    %v1486 = vpack.c.bf16 %v1166, %v1166
    %v1487 = vpack.c.bf16 %v1211, %v1211
    %v1488 = vpack.c.bf16 %v1256, %v1256
    %v1489 = vpack.c.bf16 %v1301, %v1301
    %v1490 = vpack.c.bf16 %v1346, %v1346
    %v1491 = vpack.c.bf16 %v1391, %v1391
    %v1492 = vpack.c.bf16 %v1436, %v1436
    %v1493 = vpack.c.bf16 %v1481, %v1481
    %v1494 = vld [vmem:[%s4] sm:$0xf]
    %v1495 = vld [vmem:[%s4 + $0x4] sm:$0xf]
    %v1496 = vld [vmem:[%s4 + $0x8] sm:$0xf]
    %v1497 = vld [vmem:[%s4 + $0xc] sm:$0xf]
    %v1498 = vld [vmem:[%s4 + $0x10] sm:$0xf]
    %v1499 = vld [vmem:[%s4 + $0x14] sm:$0xf]
    %v1500 = vld [vmem:[%s4 + $0x18] sm:$0xf]
    %v1501 = vld [vmem:[%s4 + $0x1c] sm:$0xf]
    %v1510 = vunpack.c.l.b16 %v1486
    %v1511 = vunpack.c.l.b16 %v1487
    %v1512 = vunpack.c.l.b16 %v1488
    %v1513 = vunpack.c.l.b16 %v1489
    %v1514 = vunpack.c.l.b16 %v1490
    %v1515 = vunpack.c.l.b16 %v1491
    %v1516 = vunpack.c.l.b16 %v1492
    %v1517 = vunpack.c.l.b16 %v1493
    %v1518 = vrot.slane %v1511, 7
    %vm1519 = vcmask 1041409
    %v1520 = vsel %vm1519, %v1518, %v1510
    %v1521 = vrot.slane %v1512, 6
    %vm1522 = vcmask 1042434
    %v1523 = vsel %vm1522, %v1521, %v1520
    %v1524 = vrot.slane %v1513, 5
    %vm1525 = vcmask 1043459
    %v1526 = vsel %vm1525, %v1524, %v1523
    %v1527 = vrot.slane %v1514, 4
    %vm1528 = vcmask 1044484
    %v1529 = vsel %vm1528, %v1527, %v1526
    %v1530 = vrot.slane %v1515, 3
    %vm1531 = vcmask 1045509
    %v1532 = vsel %vm1531, %v1530, %v1529
    %v1533 = vrot.slane %v1516, 2
    %vm1534 = vcmask 1046534
    %v1535 = vsel %vm1534, %v1533, %v1532
    %v1536 = vrot.slane %v1517, 1
    %vm1537 = vcmask 1047559
    %v1538 = vsel %vm1537, %v1536, %v1535
    %v1539 = vpack.c.b16 %v1538, %v1538
    %v1544 = vunpack.c.l.b16 %v1498
    %v1545 = vunpack.c.l.b16 %v1499
    %v1546 = vunpack.c.l.b16 %v1500
    %v1547 = vunpack.c.l.b16 %v1501
    %v1548 = vpack.c.b16 %v1545, %v1544
    %v1549 = vpack.c.b16 %v1547, %v1546
    %v1553 = vsel %vm95, %v1539, 0
    %1555 = vmatprep.subr.bf16.mxu0 0
    %1556 = vmatpush1.bf16.msra.mxu0 0
    %1557 = vmatprep.subr.bf16.mxu0 0
    %1558 = vmatpush1.bf16.msra.mxu0 0
    %1559 = vmatprep.subr.bf16.mxu0 0
    %1560 = vmatpush1.bf16.msra.mxu0 0
    %1561 = vmatprep.subr.bf16.mxu0 0
    %1562 = vmatpush1.bf16.msra.mxu0 0
    %1563 = vmatprep.subr.bf16.mxu0 0
    %1564 = vmatpush1.bf16.msra.mxu0 0
    %1565 = vmatprep.subr.bf16.mxu0 0
    %1566 = vmatpush1.bf16.msra.mxu0 0
    %1567 = vmatprep.subr.bf16.mxu0 0
    %1568 = vmatpush1.bf16.msra.mxu0 %v1549
    %1569 = vmatprep.subr.bf16.mxu0 0
    %1570 = vmatpush1.bf16.msra.mxu0 %v1548
    %1571 = vmatprep.subr.bf16.mxu0 0
    %1572 = vmatpush2.bf16.msra.mxu0 0
    %1573 = vmatprep.subr.bf16.mxu0 0
    %1574 = vmatpush2.bf16.msra.mxu0 0
    %1575 = vmatprep.subr.bf16.mxu0 0
    %1576 = vmatpush2.bf16.msra.mxu0 0
    %1577 = vmatprep.subr.bf16.mxu0 0
    %1578 = vmatpush2.bf16.msra.mxu0 0
    %1579 = vmatprep.subr.bf16.mxu0 0
    %1580 = vmatpush2.bf16.msra.mxu0 0
    %1581 = vmatprep.subr.bf16.mxu0 0
    %1582 = vmatpush2.bf16.msra.mxu0 0
    %1583 = vmatprep.subr.bf16.mxu0 0
    %1584 = vmatpush2.bf16.msra.mxu0 0
    %1585 = vmatprep.subr.bf16.mxu0 0
    %1586 = vmatpush2.bf16.msra.mxu0 0
    %1587 = vmatprep.mubr.bf16.mxu0 0
    %1588 = vmatmul.mubr.bf16.gmra.mxu0 %v1553
    %v1589 = vpop.f32.mrf.mxu0
    %v1590 = vadd.f32 0.0, %v1589
    %v1591 = vpop.f32.mrf.mxu0
    %v1592 = vpop.f32.mrf.mxu0
    %v1593 = vpop.f32.mrf.mxu0
    %1594 = vdwg.mxu0
    %v1599 = vunpack.c.l.b16 %v1494
    %v1600 = vunpack.c.l.b16 %v1495
    %v1601 = vunpack.c.l.b16 %v1496
    %v1602 = vunpack.c.l.b16 %v1497
    %v1603 = vpack.c.b16 %v1600, %v1599
    %v1604 = vpack.c.b16 %v1602, %v1601
    %1607 = vmatprep.subr.bf16.mxu0 0
    %1608 = vmatpush1.bf16.msra.mxu0 0
    %1609 = vmatprep.subr.bf16.mxu0 0
    %1610 = vmatpush1.bf16.msra.mxu0 0
    %1611 = vmatprep.subr.bf16.mxu0 0
    %1612 = vmatpush1.bf16.msra.mxu0 0
    %1613 = vmatprep.subr.bf16.mxu0 0
    %1614 = vmatpush1.bf16.msra.mxu0 0
    %1615 = vmatprep.subr.bf16.mxu0 0
    %1616 = vmatpush1.bf16.msra.mxu0 0
    %1617 = vmatprep.subr.bf16.mxu0 0
    %1618 = vmatpush1.bf16.msra.mxu0 0
    %1619 = vmatprep.subr.bf16.mxu0 0
    %1620 = vmatpush1.bf16.msra.mxu0 %v1604
    %1621 = vmatprep.subr.bf16.mxu0 0
    %1622 = vmatpush1.bf16.msra.mxu0 %v1603
    %1623 = vmatprep.subr.bf16.mxu0 0
    %1624 = vmatpush2.bf16.msra.mxu0 0
    %1625 = vmatprep.subr.bf16.mxu0 0
    %1626 = vmatpush2.bf16.msra.mxu0 0
    %1627 = vmatprep.subr.bf16.mxu0 0
    %1628 = vmatpush2.bf16.msra.mxu0 0
    %1629 = vmatprep.subr.bf16.mxu0 0
    %1630 = vmatpush2.bf16.msra.mxu0 0
    %1631 = vmatprep.subr.bf16.mxu0 0
    %1632 = vmatpush2.bf16.msra.mxu0 0
    %1633 = vmatprep.subr.bf16.mxu0 0
    %1634 = vmatpush2.bf16.msra.mxu0 0
    %1635 = vmatprep.subr.bf16.mxu0 0
    %1636 = vmatpush2.bf16.msra.mxu0 0
    %1637 = vmatprep.subr.bf16.mxu0 0
    %1638 = vmatpush2.bf16.msra.mxu0 0
    %1639 = vmatprep.mubr.bf16.mxu0 0
    %1640 = vmatmul.mubr.bf16.gmra.mxu0 %v97
    %v1641 = vpop.f32.mrf.mxu0
    %v1642 = vadd.f32 %v1590, %v1641
    %v1643 = vpop.f32.mrf.mxu0
    %v1644 = vpop.f32.mrf.mxu0
    %v1645 = vpop.f32.mrf.mxu0
    %1646 = vdwg.mxu0
    %v1647 = vld [vmem:[%s4 + $0x20] sm:$0xf]
    %v1648 = vld [vmem:[%s4 + $0x24] sm:$0xf]
    %v1649 = vld [vmem:[%s4 + $0x28] sm:$0xf]
    %v1650 = vld [vmem:[%s4 + $0x2c] sm:$0xf]
    %v1651 = vrot.slane %v1510, 1
    %v1652 = vsel %vm1519, %v1511, %v1651
    %v1653 = vrot.slane %v1512, 7
    %v1654 = vsel %vm1522, %v1653, %v1652
    %v1655 = vrot.slane %v1513, 6
    %v1656 = vsel %vm1525, %v1655, %v1654
    %v1657 = vrot.slane %v1514, 5
    %v1658 = vsel %vm1528, %v1657, %v1656
    %v1659 = vrot.slane %v1515, 4
    %v1660 = vsel %vm1531, %v1659, %v1658
    %v1661 = vrot.slane %v1516, 3
    %v1662 = vsel %vm1534, %v1661, %v1660
    %v1663 = vrot.slane %v1517, 2
    %v1664 = vsel %vm1537, %v1663, %v1662
    %v1665 = vpack.c.b16 %v1664, %v1664
    %v1670 = vunpack.c.l.b16 %v1647
    %v1671 = vunpack.c.l.b16 %v1648
    %v1672 = vunpack.c.l.b16 %v1649
    %v1673 = vunpack.c.l.b16 %v1650
    %v1674 = vpack.c.b16 %v1671, %v1670
    %v1675 = vpack.c.b16 %v1673, %v1672
    %v1679 = vsel %vm95, %v1665, 0
    %1681 = vmatprep.subr.bf16.mxu0 0
    %1682 = vmatpush1.bf16.msra.mxu0 0
    %1683 = vmatprep.subr.bf16.mxu0 0
    %1684 = vmatpush1.bf16.msra.mxu0 0
    %1685 = vmatprep.subr.bf16.mxu0 0
    %1686 = vmatpush1.bf16.msra.mxu0 0
    %1687 = vmatprep.subr.bf16.mxu0 0
    %1688 = vmatpush1.bf16.msra.mxu0 0
    %1689 = vmatprep.subr.bf16.mxu0 0
    %1690 = vmatpush1.bf16.msra.mxu0 0
    %1691 = vmatprep.subr.bf16.mxu0 0
    %1692 = vmatpush1.bf16.msra.mxu0 0
    %1693 = vmatprep.subr.bf16.mxu0 0
    %1694 = vmatpush1.bf16.msra.mxu0 %v1675
    %1695 = vmatprep.subr.bf16.mxu0 0
    %1696 = vmatpush1.bf16.msra.mxu0 %v1674
    %1697 = vmatprep.subr.bf16.mxu0 0
    %1698 = vmatpush2.bf16.msra.mxu0 0
    %1699 = vmatprep.subr.bf16.mxu0 0
    %1700 = vmatpush2.bf16.msra.mxu0 0
    %1701 = vmatprep.subr.bf16.mxu0 0
    %1702 = vmatpush2.bf16.msra.mxu0 0
    %1703 = vmatprep.subr.bf16.mxu0 0
    %1704 = vmatpush2.bf16.msra.mxu0 0
    %1705 = vmatprep.subr.bf16.mxu0 0
    %1706 = vmatpush2.bf16.msra.mxu0 0
    %1707 = vmatprep.subr.bf16.mxu0 0
    %1708 = vmatpush2.bf16.msra.mxu0 0
    %1709 = vmatprep.subr.bf16.mxu0 0
    %1710 = vmatpush2.bf16.msra.mxu0 0
    %1711 = vmatprep.subr.bf16.mxu0 0
    %1712 = vmatpush2.bf16.msra.mxu0 0
    %1713 = vmatprep.mubr.bf16.mxu0 0
    %1714 = vmatmul.mubr.bf16.gmra.mxu0 %v1679
    %v1715 = vpop.f32.mrf.mxu0
    %v1716 = vadd.f32 0.0, %v1715
    %v1717 = vpop.f32.mrf.mxu0
    %v1718 = vpop.f32.mrf.mxu0
    %v1719 = vpop.f32.mrf.mxu0
    %1720 = vdwg.mxu0
    %v1721 = vadd.f32 %v1642, %v1716
    %v1722 = vld [vmem:[%s4 + $0x30] sm:$0xf]
    %v1723 = vld [vmem:[%s4 + $0x34] sm:$0xf]
    %v1724 = vld [vmem:[%s4 + $0x38] sm:$0xf]
    %v1725 = vld [vmem:[%s4 + $0x3c] sm:$0xf]
    %v1726 = vrot.slane %v1510, 2
    %v1727 = vrot.slane %v1511, 1
    %v1728 = vsel %vm1519, %v1727, %v1726
    %v1729 = vsel %vm1522, %v1512, %v1728
    %v1730 = vrot.slane %v1513, 7
    %v1731 = vsel %vm1525, %v1730, %v1729
    %v1732 = vrot.slane %v1514, 6
    %v1733 = vsel %vm1528, %v1732, %v1731
    %v1734 = vrot.slane %v1515, 5
    %v1735 = vsel %vm1531, %v1734, %v1733
    %v1736 = vrot.slane %v1516, 4
    %v1737 = vsel %vm1534, %v1736, %v1735
    %v1738 = vrot.slane %v1517, 3
    %v1739 = vsel %vm1537, %v1738, %v1737
    %v1740 = vpack.c.b16 %v1739, %v1739
    %v1745 = vunpack.c.l.b16 %v1722
    %v1746 = vunpack.c.l.b16 %v1723
    %v1747 = vunpack.c.l.b16 %v1724
    %v1748 = vunpack.c.l.b16 %v1725
    %v1749 = vpack.c.b16 %v1746, %v1745
    %v1750 = vpack.c.b16 %v1748, %v1747
    %v1754 = vsel %vm95, %v1740, 0
    %1756 = vmatprep.subr.bf16.mxu0 0
    %1757 = vmatpush1.bf16.msra.mxu0 0
    %1758 = vmatprep.subr.bf16.mxu0 0
    %1759 = vmatpush1.bf16.msra.mxu0 0
    %1760 = vmatprep.subr.bf16.mxu0 0
    %1761 = vmatpush1.bf16.msra.mxu0 0
    %1762 = vmatprep.subr.bf16.mxu0 0
    %1763 = vmatpush1.bf16.msra.mxu0 0
    %1764 = vmatprep.subr.bf16.mxu0 0
    %1765 = vmatpush1.bf16.msra.mxu0 0
    %1766 = vmatprep.subr.bf16.mxu0 0
    %1767 = vmatpush1.bf16.msra.mxu0 0
    %1768 = vmatprep.subr.bf16.mxu0 0
    %1769 = vmatpush1.bf16.msra.mxu0 %v1750
    %1770 = vmatprep.subr.bf16.mxu0 0
    %1771 = vmatpush1.bf16.msra.mxu0 %v1749
    %1772 = vmatprep.subr.bf16.mxu0 0
    %1773 = vmatpush2.bf16.msra.mxu0 0
    %1774 = vmatprep.subr.bf16.mxu0 0
    %1775 = vmatpush2.bf16.msra.mxu0 0
    %1776 = vmatprep.subr.bf16.mxu0 0
    %1777 = vmatpush2.bf16.msra.mxu0 0
    %1778 = vmatprep.subr.bf16.mxu0 0
    %1779 = vmatpush2.bf16.msra.mxu0 0
    %1780 = vmatprep.subr.bf16.mxu0 0
    %1781 = vmatpush2.bf16.msra.mxu0 0
    %1782 = vmatprep.subr.bf16.mxu0 0
    %1783 = vmatpush2.bf16.msra.mxu0 0
    %1784 = vmatprep.subr.bf16.mxu0 0
    %1785 = vmatpush2.bf16.msra.mxu0 0
    %1786 = vmatprep.subr.bf16.mxu0 0
    %1787 = vmatpush2.bf16.msra.mxu0 0
    %1788 = vmatprep.mubr.bf16.mxu0 0
    %1789 = vmatmul.mubr.bf16.gmra.mxu0 %v1754
    %v1790 = vpop.f32.mrf.mxu0
    %v1791 = vadd.f32 0.0, %v1790
    %v1792 = vpop.f32.mrf.mxu0
    %v1793 = vpop.f32.mrf.mxu0
    %v1794 = vpop.f32.mrf.mxu0
    %1795 = vdwg.mxu0
    %v1796 = vadd.f32 %v1721, %v1791
    %v1797 = vld [vmem:[%s5] sm:$0x1]
    %v1799 = vlaneseq
    %v1800 = vshrl.u32 %v1799, 7
    %v1801 = vsub.s32 0, %v1800
    %v1802 = vrot.slane %v1797, %v1801
    %v1804 = vadd.f32 %v1796, %v1802
    %v1805 = vmax.f32 %v1804, 0.0
    %v1806 = vpack.c.bf16 %v1805, %v1805
    %v1807 = vld [vmem:[%s6] sm:$0xff]
    %v1808 = vld [vmem:[%s6 + $0x8] sm:$0xff]
    %v1809 = vld [vmem:[%s6 + $0x10] sm:$0xff]
    %v1810 = vld [vmem:[%s6 + $0x18] sm:$0xff]
    %v1811 = vld [vmem:[%s6 + $0x20] sm:$0xff]
    %v1812 = vld [vmem:[%s6 + $0x28] sm:$0xff]
    %v1813 = vld [vmem:[%s6 + $0x30] sm:$0xff]
    %v1814 = vld [vmem:[%s6 + $0x38] sm:$0xff]
    %v1815 = vld [vmem:[%s7] sm:$0x3]
    %v1817 = vlaneseq
    %v1818 = vshrl.u32 %v1817, 7
    %v1819 = vsub.s32 0, %v1818
    %v1820 = vrot.slane %v1815, %v1819
    %v1821 = vlaneseq
    %v1822 = vshrl.u32 %v1821, 7
    %v1823 = vsub.s32 1, %v1822
    %v1824 = vrot.slane %v1815, %v1823
    %v1835 = vunpack.c.l.b16 %v1807
    %v1836 = vunpack.c.h.b16 %v1807
    %v1837 = vunpack.c.l.b16 %v1808
    %v1838 = vunpack.c.h.b16 %v1808
    %v1839 = vunpack.c.l.b16 %v1809
    %v1840 = vunpack.c.h.b16 %v1809
    %v1841 = vunpack.c.l.b16 %v1810
    %v1842 = vunpack.c.h.b16 %v1810
    %v1843 = vunpack.c.l.b16 %v1811
    %v1844 = vunpack.c.h.b16 %v1811
    %v1845 = vunpack.c.l.b16 %v1812
    %v1846 = vunpack.c.h.b16 %v1812
    %v1847 = vunpack.c.l.b16 %v1813
    %v1848 = vunpack.c.h.b16 %v1813
    %v1849 = vunpack.c.l.b16 %v1814
    %v1850 = vunpack.c.h.b16 %v1814
    %v1851 = vpack.c.b16 %v1837, %v1835
    %v1852 = vpack.c.b16 %v1838, %v1836
    %v1853 = vpack.c.b16 %v1841, %v1839
    %v1854 = vpack.c.b16 %v1842, %v1840
    %v1855 = vpack.c.b16 %v1845, %v1843
    %v1856 = vpack.c.b16 %v1846, %v1844
    %v1857 = vpack.c.b16 %v1849, %v1847
    %v1858 = vpack.c.b16 %v1850, %v1848
    %vm1867 = vcmask 523264
    %v1869 = vsel %vm1867, %v1806, 0
    %1871 = vmatprep.subr.bf16.mxu0 0
    %1872 = vmatpush1.bf16.msra.mxu0 0
    %1873 = vmatprep.subr.bf16.mxu0 0
    %1874 = vmatpush1.bf16.msra.mxu0 0
    %1875 = vmatprep.subr.bf16.mxu0 0
    %1876 = vmatpush1.bf16.msra.mxu0 0
    %1877 = vmatprep.subr.bf16.mxu0 0
    %1878 = vmatpush1.bf16.msra.mxu0 0
    %1879 = vmatprep.subr.bf16.mxu0 %v1858
    %1880 = vmatpush1.bf16.msra.mxu0 %v1857
    %1881 = vmatprep.subr.bf16.mxu0 %v1856
    %1882 = vmatpush1.bf16.msra.mxu0 %v1855
    %1883 = vmatprep.subr.bf16.mxu0 %v1854
    %1884 = vmatpush1.bf16.msra.mxu0 %v1853
    %1885 = vmatprep.subr.bf16.mxu0 %v1852
    %1886 = vmatpush1.bf16.msra.mxu0 %v1851
    %1887 = vmatprep.subr.bf16.mxu0 0
    %1888 = vmatpush2.bf16.msra.mxu0 0
    %1889 = vmatprep.subr.bf16.mxu0 0
    %1890 = vmatpush2.bf16.msra.mxu0 0
    %1891 = vmatprep.subr.bf16.mxu0 0
    %1892 = vmatpush2.bf16.msra.mxu0 0
    %1893 = vmatprep.subr.bf16.mxu0 0
    %1894 = vmatpush2.bf16.msra.mxu0 0
    %1895 = vmatprep.subr.bf16.mxu0 0
    %1896 = vmatpush2.bf16.msra.mxu0 0
    %1897 = vmatprep.subr.bf16.mxu0 0
    %1898 = vmatpush2.bf16.msra.mxu0 0
    %1899 = vmatprep.subr.bf16.mxu0 0
    %1900 = vmatpush2.bf16.msra.mxu0 0
    %1901 = vmatprep.subr.bf16.mxu0 0
    %1902 = vmatpush2.bf16.msra.mxu0 0
    %1903 = vmatprep.mubr.bf16.mxu0 0
    %1904 = vmatmul.mubr.bf16.gmra.mxu0 %v1869
    %v1905 = vpop.f32.mrf.mxu0
    %v1906 = vadd.f32 %v1820, %v1905
    %v1907 = vpop.f32.mrf.mxu0
    %v1908 = vadd.f32 %v1824, %v1907
    %v1909 = vpop.f32.mrf.mxu0
    %v1910 = vpop.f32.mrf.mxu0
    %1911 = vdwg.mxu0
    %v1912 = vpack.c.bf16 %v1908, %v1908
    %v1915 = vunpack.c.l.s4 1966171168
    %v1916 = vunpack.c.0.s8 %v1915
    %v1917 = vlaneseq
    %v1918 = vshrl.u32 %v1917, 7
    %v1919 = vsub.s32 %v1916, %v1918
    %v1920 = vrot.slane %v1912, %v1919
    %v1921 = vcombine.high %v1920, %v1920
    %v1923 = vunpack.c.l.s4 1966171168
    %v1924 = vunpack.c.0.s8 %v1923
    %v1925 = vlaneseq
    %v1926 = vshrl.u32 %v1925, 7
    %v1927 = vsub.s32 %v1924, %v1926
    %v1928 = vrot.slane %v1920, %v1927
    %v1930 = vunpack.c.l.s4 1966171168
    %v1931 = vunpack.c.0.s8 %v1930
    %v1932 = vlaneseq
    %v1933 = vshrl.u32 %v1932, 7
    %v1934 = vsub.s32 %v1931, %v1933
    %v1935 = vrot.slane %v1921, %v1934
    %v1936 = vcombine.high %v1928, %v1928
    %v1937 = vcombine.high %v1935, %v1935
    %v1938 = vunpack.i.l.s16 %v1928
    %v1939 = vunpack.i.h.s16 %v1928
    %v1940 = vunpack.i.l.s16 %v1935
    %v1941 = vunpack.i.h.s16 %v1935
    %v1942 = vunpack.i.l.s16 %v1936
    %v1943 = vunpack.i.h.s16 %v1936
    %v1944 = vunpack.i.l.s16 %v1937
    %v1945 = vunpack.i.h.s16 %v1937
    %v1946 = vpack.i.b16 %v1938, %v1938
    %v1947 = vlaneseq
    %v1948 = vshrl.u32 %v1947, 7
    %v1949 = vsub.s32 0, %v1948
    %v1950 = vrot.slane %v1946, %v1949
    %v1952 = vsel %vm95, %v1950, 0
    %v1955 = vsel %vm95, %v49, 0
    %1957 = vmatprep.subr.bf16.mxu0 0
    %1958 = vmatpush1.bf16.xpose.msra.mxu0 0
    %1959 = vmatprep.subr.bf16.mxu0 0
    %1960 = vmatpush1.bf16.xpose.msra.mxu0 0
    %1961 = vmatprep.subr.bf16.mxu0 0
    %1962 = vmatpush1.bf16.xpose.msra.mxu0 0
    %1963 = vmatprep.subr.bf16.mxu0 0
    %1964 = vmatpush1.bf16.xpose.msra.mxu0 0
    %1965 = vmatprep.subr.bf16.mxu0 0
    %1966 = vmatpush1.bf16.xpose.msra.mxu0 0
    %1967 = vmatprep.subr.bf16.mxu0 0
    %1968 = vmatpush1.bf16.xpose.msra.mxu0 0
    %1969 = vmatprep.subr.bf16.mxu0 0
    %1970 = vmatpush1.bf16.xpose.msra.mxu0 0
    %1971 = vmatprep.subr.bf16.mxu0 0
    %1972 = vmatpush1.bf16.xpose.msra.mxu0 %v1955
    %1973 = vmatprep.subr.bf16.mxu0 0
    %1974 = vmatpush2.bf16.xpose.msra.mxu0 0
    %1975 = vmatprep.subr.bf16.mxu0 0
    %1976 = vmatpush2.bf16.xpose.msra.mxu0 0
    %1977 = vmatprep.subr.bf16.mxu0 0
    %1978 = vmatpush2.bf16.xpose.msra.mxu0 0
    %1979 = vmatprep.subr.bf16.mxu0 0
    %1980 = vmatpush2.bf16.xpose.msra.mxu0 0
    %1981 = vmatprep.subr.bf16.mxu0 0
    %1982 = vmatpush2.bf16.xpose.msra.mxu0 0
    %1983 = vmatprep.subr.bf16.mxu0 0
    %1984 = vmatpush2.bf16.xpose.msra.mxu0 0
    %1985 = vmatprep.subr.bf16.mxu0 0
    %1986 = vmatpush2.bf16.xpose.msra.mxu0 0
    %1987 = vmatprep.subr.bf16.mxu0 0
    %1988 = vmatpush2.bf16.xpose.msra.mxu0 0
    %1989 = vmatprep.mubr.bf16.mxu0 0
    %1990 = vmatmul.mubr.bf16.gmra.mxu0 %v1952
    %v1991 = vpop.f32.mrf.mxu0
    %v1992 = vadd.f32 0.0, %v1991
    %v1993 = vpop.f32.mrf.mxu0
    %v1994 = vpop.f32.mrf.mxu0
    %v1995 = vpop.f32.mrf.mxu0
    %1996 = vdwg.mxu0
    %v1997 = vpack.i.b16 %v1939, %v1939
    %v1998 = vlaneseq
    %v1999 = vshrl.u32 %v1998, 7
    %v2000 = vsub.s32 0, %v1999
    %v2001 = vrot.slane %v1997, %v2000
    %v2003 = vsel %vm95, %v2001, 0
    %v2006 = vsel %vm95, %v53, 0
    %2008 = vmatprep.subr.bf16.mxu0 0
    %2009 = vmatpush1.bf16.xpose.msra.mxu0 0
    %2010 = vmatprep.subr.bf16.mxu0 0
    %2011 = vmatpush1.bf16.xpose.msra.mxu0 0
    %2012 = vmatprep.subr.bf16.mxu0 0
    %2013 = vmatpush1.bf16.xpose.msra.mxu0 0
    %2014 = vmatprep.subr.bf16.mxu0 0
    %2015 = vmatpush1.bf16.xpose.msra.mxu0 0
    %2016 = vmatprep.subr.bf16.mxu0 0
    %2017 = vmatpush1.bf16.xpose.msra.mxu0 0
    %2018 = vmatprep.subr.bf16.mxu0 0
    %2019 = vmatpush1.bf16.xpose.msra.mxu0 0
    %2020 = vmatprep.subr.bf16.mxu0 0
    %2021 = vmatpush1.bf16.xpose.msra.mxu0 0
    %2022 = vmatprep.subr.bf16.mxu0 0
    %2023 = vmatpush1.bf16.xpose.msra.mxu0 %v2006
    %2024 = vmatprep.subr.bf16.mxu0 0
    %2025 = vmatpush2.bf16.xpose.msra.mxu0 0
    %2026 = vmatprep.subr.bf16.mxu0 0
    %2027 = vmatpush2.bf16.xpose.msra.mxu0 0
    %2028 = vmatprep.subr.bf16.mxu0 0
    %2029 = vmatpush2.bf16.xpose.msra.mxu0 0
    %2030 = vmatprep.subr.bf16.mxu0 0
    %2031 = vmatpush2.bf16.xpose.msra.mxu0 0
    %2032 = vmatprep.subr.bf16.mxu0 0
    %2033 = vmatpush2.bf16.xpose.msra.mxu0 0
    %2034 = vmatprep.subr.bf16.mxu0 0
    %2035 = vmatpush2.bf16.xpose.msra.mxu0 0
    %2036 = vmatprep.subr.bf16.mxu0 0
    %2037 = vmatpush2.bf16.xpose.msra.mxu0 0
    %2038 = vmatprep.subr.bf16.mxu0 0
    %2039 = vmatpush2.bf16.xpose.msra.mxu0 0
    %2040 = vmatprep.mubr.bf16.mxu0 0
    %2041 = vmatmul.mubr.bf16.gmra.mxu0 %v2003
    %v2042 = vpop.f32.mrf.mxu0
    %v2043 = vadd.f32 0.0, %v2042
    %v2044 = vpop.f32.mrf.mxu0
    %v2045 = vpop.f32.mrf.mxu0
    %v2046 = vpop.f32.mrf.mxu0
    %2047 = vdwg.mxu0
    %v2048 = vpack.i.b16 %v1940, %v1940
    %v2049 = vlaneseq
    %v2050 = vshrl.u32 %v2049, 7
    %v2051 = vsub.s32 0, %v2050
    %v2052 = vrot.slane %v2048, %v2051
    %v2054 = vsel %vm95, %v2052, 0
    %v2057 = vsel %vm95, %v57, 0
    %2059 = vmatprep.subr.bf16.mxu0 0
    %2060 = vmatpush1.bf16.xpose.msra.mxu0 0
    %2061 = vmatprep.subr.bf16.mxu0 0
    %2062 = vmatpush1.bf16.xpose.msra.mxu0 0
    %2063 = vmatprep.subr.bf16.mxu0 0
    %2064 = vmatpush1.bf16.xpose.msra.mxu0 0
    %2065 = vmatprep.subr.bf16.mxu0 0
    %2066 = vmatpush1.bf16.xpose.msra.mxu0 0
    %2067 = vmatprep.subr.bf16.mxu0 0
    %2068 = vmatpush1.bf16.xpose.msra.mxu0 0
    %2069 = vmatprep.subr.bf16.mxu0 0
    %2070 = vmatpush1.bf16.xpose.msra.mxu0 0
    %2071 = vmatprep.subr.bf16.mxu0 0
    %2072 = vmatpush1.bf16.xpose.msra.mxu0 0
    %2073 = vmatprep.subr.bf16.mxu0 0
    %2074 = vmatpush1.bf16.xpose.msra.mxu0 %v2057
    %2075 = vmatprep.subr.bf16.mxu0 0
    %2076 = vmatpush2.bf16.xpose.msra.mxu0 0
    %2077 = vmatprep.subr.bf16.mxu0 0
    %2078 = vmatpush2.bf16.xpose.msra.mxu0 0
    %2079 = vmatprep.subr.bf16.mxu0 0
    %2080 = vmatpush2.bf16.xpose.msra.mxu0 0
    %2081 = vmatprep.subr.bf16.mxu0 0
    %2082 = vmatpush2.bf16.xpose.msra.mxu0 0
    %2083 = vmatprep.subr.bf16.mxu0 0
    %2084 = vmatpush2.bf16.xpose.msra.mxu0 0
    %2085 = vmatprep.subr.bf16.mxu0 0
    %2086 = vmatpush2.bf16.xpose.msra.mxu0 0
    %2087 = vmatprep.subr.bf16.mxu0 0
    %2088 = vmatpush2.bf16.xpose.msra.mxu0 0
    %2089 = vmatprep.subr.bf16.mxu0 0
    %2090 = vmatpush2.bf16.xpose.msra.mxu0 0
    %2091 = vmatprep.mubr.bf16.mxu0 0
    %2092 = vmatmul.mubr.bf16.gmra.mxu0 %v2054
    %v2093 = vpop.f32.mrf.mxu0
    %v2094 = vadd.f32 0.0, %v2093
    %v2095 = vpop.f32.mrf.mxu0
    %v2096 = vpop.f32.mrf.mxu0
    %v2097 = vpop.f32.mrf.mxu0
    %2098 = vdwg.mxu0
    %v2099 = vpack.i.b16 %v1941, %v1941
    %v2100 = vlaneseq
    %v2101 = vshrl.u32 %v2100, 7
    %v2102 = vsub.s32 0, %v2101
    %v2103 = vrot.slane %v2099, %v2102
    %v2105 = vsel %vm95, %v2103, 0
    %v2108 = vsel %vm95, %v61, 0
    %2110 = vmatprep.subr.bf16.mxu0 0
    %2111 = vmatpush1.bf16.xpose.msra.mxu0 0
    %2112 = vmatprep.subr.bf16.mxu0 0
    %2113 = vmatpush1.bf16.xpose.msra.mxu0 0
    %2114 = vmatprep.subr.bf16.mxu0 0
    %2115 = vmatpush1.bf16.xpose.msra.mxu0 0
    %2116 = vmatprep.subr.bf16.mxu0 0
    %2117 = vmatpush1.bf16.xpose.msra.mxu0 0
    %2118 = vmatprep.subr.bf16.mxu0 0
    %2119 = vmatpush1.bf16.xpose.msra.mxu0 0
    %2120 = vmatprep.subr.bf16.mxu0 0
    %2121 = vmatpush1.bf16.xpose.msra.mxu0 0
    %2122 = vmatprep.subr.bf16.mxu0 0
    %2123 = vmatpush1.bf16.xpose.msra.mxu0 0
    %2124 = vmatprep.subr.bf16.mxu0 0
    %2125 = vmatpush1.bf16.xpose.msra.mxu0 %v2108
    %2126 = vmatprep.subr.bf16.mxu0 0
    %2127 = vmatpush2.bf16.xpose.msra.mxu0 0
    %2128 = vmatprep.subr.bf16.mxu0 0
    %2129 = vmatpush2.bf16.xpose.msra.mxu0 0
    %2130 = vmatprep.subr.bf16.mxu0 0
    %2131 = vmatpush2.bf16.xpose.msra.mxu0 0
    %2132 = vmatprep.subr.bf16.mxu0 0
    %2133 = vmatpush2.bf16.xpose.msra.mxu0 0
    %2134 = vmatprep.subr.bf16.mxu0 0
    %2135 = vmatpush2.bf16.xpose.msra.mxu0 0
    %2136 = vmatprep.subr.bf16.mxu0 0
    %2137 = vmatpush2.bf16.xpose.msra.mxu0 0
    %2138 = vmatprep.subr.bf16.mxu0 0
    %2139 = vmatpush2.bf16.xpose.msra.mxu0 0
    %2140 = vmatprep.subr.bf16.mxu0 0
    %2141 = vmatpush2.bf16.xpose.msra.mxu0 0
    %2142 = vmatprep.mubr.bf16.mxu0 0
    %2143 = vmatmul.mubr.bf16.gmra.mxu0 %v2105
    %v2144 = vpop.f32.mrf.mxu0
    %v2145 = vadd.f32 0.0, %v2144
    %v2146 = vpop.f32.mrf.mxu0
    %v2147 = vpop.f32.mrf.mxu0
    %v2148 = vpop.f32.mrf.mxu0
    %2149 = vdwg.mxu0
    %v2150 = vpack.i.b16 %v1942, %v1942
    %v2151 = vlaneseq
    %v2152 = vshrl.u32 %v2151, 7
    %v2153 = vsub.s32 0, %v2152
    %v2154 = vrot.slane %v2150, %v2153
    %v2156 = vsel %vm95, %v2154, 0
    %v2159 = vsel %vm95, %v65, 0
    %2161 = vmatprep.subr.bf16.mxu0 0
    %2162 = vmatpush1.bf16.xpose.msra.mxu0 0
    %2163 = vmatprep.subr.bf16.mxu0 0
    %2164 = vmatpush1.bf16.xpose.msra.mxu0 0
    %2165 = vmatprep.subr.bf16.mxu0 0
    %2166 = vmatpush1.bf16.xpose.msra.mxu0 0
    %2167 = vmatprep.subr.bf16.mxu0 0
    %2168 = vmatpush1.bf16.xpose.msra.mxu0 0
    %2169 = vmatprep.subr.bf16.mxu0 0
    %2170 = vmatpush1.bf16.xpose.msra.mxu0 0
    %2171 = vmatprep.subr.bf16.mxu0 0
    %2172 = vmatpush1.bf16.xpose.msra.mxu0 0
    %2173 = vmatprep.subr.bf16.mxu0 0
    %2174 = vmatpush1.bf16.xpose.msra.mxu0 0
    %2175 = vmatprep.subr.bf16.mxu0 0
    %2176 = vmatpush1.bf16.xpose.msra.mxu0 %v2159
    %2177 = vmatprep.subr.bf16.mxu0 0
    %2178 = vmatpush2.bf16.xpose.msra.mxu0 0
    %2179 = vmatprep.subr.bf16.mxu0 0
    %2180 = vmatpush2.bf16.xpose.msra.mxu0 0
    %2181 = vmatprep.subr.bf16.mxu0 0
    %2182 = vmatpush2.bf16.xpose.msra.mxu0 0
    %2183 = vmatprep.subr.bf16.mxu0 0
    %2184 = vmatpush2.bf16.xpose.msra.mxu0 0
    %2185 = vmatprep.subr.bf16.mxu0 0
    %2186 = vmatpush2.bf16.xpose.msra.mxu0 0
    %2187 = vmatprep.subr.bf16.mxu0 0
    %2188 = vmatpush2.bf16.xpose.msra.mxu0 0
    %2189 = vmatprep.subr.bf16.mxu0 0
    %2190 = vmatpush2.bf16.xpose.msra.mxu0 0
    %2191 = vmatprep.subr.bf16.mxu0 0
    %2192 = vmatpush2.bf16.xpose.msra.mxu0 0
    %2193 = vmatprep.mubr.bf16.mxu0 0
    %2194 = vmatmul.mubr.bf16.gmra.mxu0 %v2156
    %v2195 = vpop.f32.mrf.mxu0
    %v2196 = vadd.f32 0.0, %v2195
    %v2197 = vpop.f32.mrf.mxu0
    %v2198 = vpop.f32.mrf.mxu0
    %v2199 = vpop.f32.mrf.mxu0
    %2200 = vdwg.mxu0
    %v2201 = vpack.i.b16 %v1943, %v1943
    %v2202 = vlaneseq
    %v2203 = vshrl.u32 %v2202, 7
    %v2204 = vsub.s32 0, %v2203
    %v2205 = vrot.slane %v2201, %v2204
    %v2207 = vsel %vm95, %v2205, 0
    %v2210 = vsel %vm95, %v69, 0
    %2212 = vmatprep.subr.bf16.mxu0 0
    %2213 = vmatpush1.bf16.xpose.msra.mxu0 0
    %2214 = vmatprep.subr.bf16.mxu0 0
    %2215 = vmatpush1.bf16.xpose.msra.mxu0 0
    %2216 = vmatprep.subr.bf16.mxu0 0
    %2217 = vmatpush1.bf16.xpose.msra.mxu0 0
    %2218 = vmatprep.subr.bf16.mxu0 0
    %2219 = vmatpush1.bf16.xpose.msra.mxu0 0
    %2220 = vmatprep.subr.bf16.mxu0 0
    %2221 = vmatpush1.bf16.xpose.msra.mxu0 0
    %2222 = vmatprep.subr.bf16.mxu0 0
    %2223 = vmatpush1.bf16.xpose.msra.mxu0 0
    %2224 = vmatprep.subr.bf16.mxu0 0
    %2225 = vmatpush1.bf16.xpose.msra.mxu0 0
    %2226 = vmatprep.subr.bf16.mxu0 0
    %2227 = vmatpush1.bf16.xpose.msra.mxu0 %v2210
    %2228 = vmatprep.subr.bf16.mxu0 0
    %2229 = vmatpush2.bf16.xpose.msra.mxu0 0
    %2230 = vmatprep.subr.bf16.mxu0 0
    %2231 = vmatpush2.bf16.xpose.msra.mxu0 0
    %2232 = vmatprep.subr.bf16.mxu0 0
    %2233 = vmatpush2.bf16.xpose.msra.mxu0 0
    %2234 = vmatprep.subr.bf16.mxu0 0
    %2235 = vmatpush2.bf16.xpose.msra.mxu0 0
    %2236 = vmatprep.subr.bf16.mxu0 0
    %2237 = vmatpush2.bf16.xpose.msra.mxu0 0
    %2238 = vmatprep.subr.bf16.mxu0 0
    %2239 = vmatpush2.bf16.xpose.msra.mxu0 0
    %2240 = vmatprep.subr.bf16.mxu0 0
    %2241 = vmatpush2.bf16.xpose.msra.mxu0 0
    %2242 = vmatprep.subr.bf16.mxu0 0
    %2243 = vmatpush2.bf16.xpose.msra.mxu0 0
    %2244 = vmatprep.mubr.bf16.mxu0 0
    %2245 = vmatmul.mubr.bf16.gmra.mxu0 %v2207
    %v2246 = vpop.f32.mrf.mxu0
    %v2247 = vadd.f32 0.0, %v2246
    %v2248 = vpop.f32.mrf.mxu0
    %v2249 = vpop.f32.mrf.mxu0
    %v2250 = vpop.f32.mrf.mxu0
    %2251 = vdwg.mxu0
    %v2252 = vpack.i.b16 %v1944, %v1944
    %v2253 = vlaneseq
    %v2254 = vshrl.u32 %v2253, 7
    %v2255 = vsub.s32 0, %v2254
    %v2256 = vrot.slane %v2252, %v2255
    %v2258 = vsel %vm95, %v2256, 0
    %v2261 = vsel %vm95, %v73, 0
    %2263 = vmatprep.subr.bf16.mxu0 0
    %2264 = vmatpush1.bf16.xpose.msra.mxu0 0
    %2265 = vmatprep.subr.bf16.mxu0 0
    %2266 = vmatpush1.bf16.xpose.msra.mxu0 0
    %2267 = vmatprep.subr.bf16.mxu0 0
    %2268 = vmatpush1.bf16.xpose.msra.mxu0 0
    %2269 = vmatprep.subr.bf16.mxu0 0
    %2270 = vmatpush1.bf16.xpose.msra.mxu0 0
    %2271 = vmatprep.subr.bf16.mxu0 0
    %2272 = vmatpush1.bf16.xpose.msra.mxu0 0
    %2273 = vmatprep.subr.bf16.mxu0 0
    %2274 = vmatpush1.bf16.xpose.msra.mxu0 0
    %2275 = vmatprep.subr.bf16.mxu0 0
    %2276 = vmatpush1.bf16.xpose.msra.mxu0 0
    %2277 = vmatprep.subr.bf16.mxu0 0
    %2278 = vmatpush1.bf16.xpose.msra.mxu0 %v2261
    %2279 = vmatprep.subr.bf16.mxu0 0
    %2280 = vmatpush2.bf16.xpose.msra.mxu0 0
    %2281 = vmatprep.subr.bf16.mxu0 0
    %2282 = vmatpush2.bf16.xpose.msra.mxu0 0
    %2283 = vmatprep.subr.bf16.mxu0 0
    %2284 = vmatpush2.bf16.xpose.msra.mxu0 0
    %2285 = vmatprep.subr.bf16.mxu0 0
    %2286 = vmatpush2.bf16.xpose.msra.mxu0 0
    %2287 = vmatprep.subr.bf16.mxu0 0
    %2288 = vmatpush2.bf16.xpose.msra.mxu0 0
    %2289 = vmatprep.subr.bf16.mxu0 0
    %2290 = vmatpush2.bf16.xpose.msra.mxu0 0
    %2291 = vmatprep.subr.bf16.mxu0 0
    %2292 = vmatpush2.bf16.xpose.msra.mxu0 0
    %2293 = vmatprep.subr.bf16.mxu0 0
    %2294 = vmatpush2.bf16.xpose.msra.mxu0 0
    %2295 = vmatprep.mubr.bf16.mxu0 0
    %2296 = vmatmul.mubr.bf16.gmra.mxu0 %v2258
    %v2297 = vpop.f32.mrf.mxu0
    %v2298 = vadd.f32 0.0, %v2297
    %v2299 = vpop.f32.mrf.mxu0
    %v2300 = vpop.f32.mrf.mxu0
    %v2301 = vpop.f32.mrf.mxu0
    %2302 = vdwg.mxu0
    %v2303 = vpack.i.b16 %v1945, %v1945
    %v2304 = vlaneseq
    %v2305 = vshrl.u32 %v2304, 7
    %v2306 = vsub.s32 0, %v2305
    %v2307 = vrot.slane %v2303, %v2306
    %v2309 = vsel %vm95, %v2307, 0
    %v2312 = vsel %vm95, %v77, 0
    %2314 = vmatprep.subr.bf16.mxu0 0
    %2315 = vmatpush1.bf16.xpose.msra.mxu0 0
    %2316 = vmatprep.subr.bf16.mxu0 0
    %2317 = vmatpush1.bf16.xpose.msra.mxu0 0
    %2318 = vmatprep.subr.bf16.mxu0 0
    %2319 = vmatpush1.bf16.xpose.msra.mxu0 0
    %2320 = vmatprep.subr.bf16.mxu0 0
    %2321 = vmatpush1.bf16.xpose.msra.mxu0 0
    %2322 = vmatprep.subr.bf16.mxu0 0
    %2323 = vmatpush1.bf16.xpose.msra.mxu0 0
    %2324 = vmatprep.subr.bf16.mxu0 0
    %2325 = vmatpush1.bf16.xpose.msra.mxu0 0
    %2326 = vmatprep.subr.bf16.mxu0 0
    %2327 = vmatpush1.bf16.xpose.msra.mxu0 0
    %2328 = vmatprep.subr.bf16.mxu0 0
    %2329 = vmatpush1.bf16.xpose.msra.mxu0 %v2312
    %2330 = vmatprep.subr.bf16.mxu0 0
    %2331 = vmatpush2.bf16.xpose.msra.mxu0 0
    %2332 = vmatprep.subr.bf16.mxu0 0
    %2333 = vmatpush2.bf16.xpose.msra.mxu0 0
    %2334 = vmatprep.subr.bf16.mxu0 0
    %2335 = vmatpush2.bf16.xpose.msra.mxu0 0
    %2336 = vmatprep.subr.bf16.mxu0 0
    %2337 = vmatpush2.bf16.xpose.msra.mxu0 0
    %2338 = vmatprep.subr.bf16.mxu0 0
    %2339 = vmatpush2.bf16.xpose.msra.mxu0 0
    %2340 = vmatprep.subr.bf16.mxu0 0
    %2341 = vmatpush2.bf16.xpose.msra.mxu0 0
    %2342 = vmatprep.subr.bf16.mxu0 0
    %2343 = vmatpush2.bf16.xpose.msra.mxu0 0
    %2344 = vmatprep.subr.bf16.mxu0 0
    %2345 = vmatpush2.bf16.xpose.msra.mxu0 0
    %2346 = vmatprep.mubr.bf16.mxu0 0
    %2347 = vmatmul.mubr.bf16.gmra.mxu0 %v2309
    %v2348 = vpop.f32.mrf.mxu0
    %v2349 = vadd.f32 0.0, %v2348
    %v2350 = vpop.f32.mrf.mxu0
    %v2351 = vpop.f32.mrf.mxu0
    %v2352 = vpop.f32.mrf.mxu0
    %2353 = vdwg.mxu0
    %2354 = vset.pattern.permute.xlu0 1
    %2355 = vperm.xlu0 %2354, %v78
    %v2356 = vpop.permute.xlu0 %2355
    %vm2357 = vcmp.lt.s32.totalorder %v776, %v2356
    %v2366 = vrot.slane %v2043, 7
    %v2367 = vsel %vm1519, %v2366, %v1992
    %v2368 = vrot.slane %v2094, 6
    %v2369 = vsel %vm1522, %v2368, %v2367
    %v2370 = vrot.slane %v2145, 5
    %v2371 = vsel %vm1525, %v2370, %v2369
    %v2372 = vrot.slane %v2196, 4
    %v2373 = vsel %vm1528, %v2372, %v2371
    %v2374 = vrot.slane %v2247, 3
    %v2375 = vsel %vm1531, %v2374, %v2373
    %v2376 = vrot.slane %v2298, 2
    %v2377 = vsel %vm1534, %v2376, %v2375
    %v2378 = vrot.slane %v2349, 1
    %v2379 = vsel %vm1537, %v2378, %v2377
    %v2381 = vsel %vm2357, %v2379, -1e+09
    %v2382 = vadd.s32 %v778, 41
    %vm2383 = vcmp.eq.s32.totalorder %v776, %v2382
    %v2384 = vsel %vm2383, 1, 0
    %v2385 = vcvt.s32.f32 %v2384
    %vm2386 = vcmask 64512
    %v2388 = vsel %vm2386, %v2381, 0
    %2390 = vmatprep.subr.mxu0 0.0
    %2391 = vmatpush1.msra.mxu0 0.0
    %2392 = vmatprep.subr.mxu0 0.0
    %2393 = vmatpush1.msra.mxu0 0.0
    %2394 = vmatprep.subr.mxu0 0.0
    %2395 = vmatpush1.msra.mxu0 0.0
    %2396 = vmatprep.subr.mxu0 0.0
    %2397 = vmatpush1.msra.mxu0 0.0
    %2398 = vmatprep.subr.mxu0 0.0
    %2399 = vmatpush1.msra.mxu0 0.0
    %2400 = vmatprep.subr.mxu0 0.0
    %2401 = vmatpush1.msra.mxu0 0.0
    %2402 = vmatprep.subr.mxu0 0.0
    %2403 = vmatpush1.msra.mxu0 0.0
    %2404 = vmatprep.subr.mxu0 0.0
    %2405 = vmatpush1.msra.mxu0 0.0
    %2406 = vmatprep.subr.mxu0 0.0
    %2407 = vmatpush1.msra.mxu0 0.0
    %2408 = vmatprep.subr.mxu0 0.0
    %2409 = vmatpush1.msra.mxu0 0.0
    %2410 = vmatprep.subr.mxu0 0.0
    %2411 = vmatpush1.msra.mxu0 0.0
    %2412 = vmatprep.subr.mxu0 0.0
    %2413 = vmatpush1.msra.mxu0 0.0
    %2414 = vmatprep.subr.mxu0 0.0
    %2415 = vmatpush1.msra.mxu0 0.0
    %2416 = vmatprep.subr.mxu0 0.0
    %2417 = vmatpush1.msra.mxu0 0.0
    %2418 = vmatprep.subr.mxu0 0.0
    %2419 = vmatpush1.msra.mxu0 0.0
    %2420 = vmatprep.subr.mxu0 0.0
    %2421 = vmatpush1.msra.mxu0 %v2385
    %2422 = vmatprep.subr.mxu0 0.0
    %2423 = vmatpush2.msra.mxu0 0.0
    %2424 = vmatprep.subr.mxu0 0.0
    %2425 = vmatpush2.msra.mxu0 0.0
    %2426 = vmatprep.subr.mxu0 0.0
    %2427 = vmatpush2.msra.mxu0 0.0
    %2428 = vmatprep.subr.mxu0 0.0
    %2429 = vmatpush2.msra.mxu0 0.0
    %2430 = vmatprep.subr.mxu0 0.0
    %2431 = vmatpush2.msra.mxu0 0.0
    %2432 = vmatprep.subr.mxu0 0.0
    %2433 = vmatpush2.msra.mxu0 0.0
    %2434 = vmatprep.subr.mxu0 0.0
    %2435 = vmatpush2.msra.mxu0 0.0
    %2436 = vmatprep.subr.mxu0 0.0
    %2437 = vmatpush2.msra.mxu0 0.0
    %2438 = vmatprep.subr.mxu0 0.0
    %2439 = vmatpush2.msra.mxu0 0.0
    %2440 = vmatprep.subr.mxu0 0.0
    %2441 = vmatpush2.msra.mxu0 0.0
    %2442 = vmatprep.subr.mxu0 0.0
    %2443 = vmatpush2.msra.mxu0 0.0
    %2444 = vmatprep.subr.mxu0 0.0
    %2445 = vmatpush2.msra.mxu0 0.0
    %2446 = vmatprep.subr.mxu0 0.0
    %2447 = vmatpush2.msra.mxu0 0.0
    %2448 = vmatprep.subr.mxu0 0.0
    %2449 = vmatpush2.msra.mxu0 0.0
    %2450 = vmatprep.subr.mxu0 0.0
    %2451 = vmatpush2.msra.mxu0 0.0
    %2452 = vmatprep.subr.mxu0 0.0
    %2453 = vmatpush2.msra.mxu0 0.0
    %2454 = vmatprep.mubr.f32.mxu0 0.0
    %2455 = vmatmul.mubr.f32.gmra.mxu0 %v2388
    %v2456 = vpop.f32.mrf.mxu0
    %v2457 = vadd.f32 0.0, %v2456
    %v2458 = vpop.f32.mrf.mxu0
    %2459 = vdwg.mxu0
    %v2460 = vadd.f32 %v1906, %v2457
    %2461 = vmax.xlane.f32.xlu0 %v2460
    %v2462 = vpop.xlane.xlu0 %2461
    %v2463 = vsub.f32 %v2460, %v2462
    %v2464 = vmul.f32 %v2463, 1.442695
    %v2465 = vpow.pop %v2464
    %2466 = vadd.xlane.f32.xlu0 %v2465
    %v2467 = vpop.xlane.xlu0 %2466
    %v2468 = vrcp.pop %v2467
    %v2469 = vmul.f32 1.0, %v2468
    %v2470 = vmul.f32 %v2465, %v2469
    %2471 = vst [vmem:[#allocation5] sm:$0xff] %v2470
    // Predicated region
    $region38: #{tpu_custom_call.1} parent=1 // pred_check
      _
    $region39: #{tpu_custom_call.1} parent=1 // pred_check_branch
      %2473 = sbr.rel (0) target = $region41
    $region40: #{tpu_custom_call.1} parent=1 // pred_region
      %s2475 = ssub.s32 128, 128
      %2476 = vsyncadd [#allocation4], %s2475
      %s2478 = sshll.u32 [#allocation5], 4
      %s2479 = int_to_ptr.vmem [resolvable:$true] %s2478
      %2481 = dma.vmem_to_hbm [thread:$0]  %s2479, 128, %s8, [#allocation4]
    $region41: #{tpu_custom_call.1} parent=1 // pred_fallthru
      _
    // Predicated region
    $region42: #{tpu_custom_call.1} parent=1 // pred_check
      _
    $region43: #{tpu_custom_call.1} parent=1 // pred_check_branch
      %2483 = sbr.rel (0) target = $region45
    $region44: #{tpu_custom_call.1} parent=1 // pred_region
      %2484 = dma.done [#allocation4], 128
    $region45: #{tpu_custom_call.1} parent=1 // pred_fallthru
      _
    %2485 = vsyncpa [#allocation3], 1
    %2486 = vsyncpa [#allocation4], 1

</llo_original>
